<compile_context>
chip_gen: v7x
topology: tpu7x:2x2x1
jax: 0.10.0
libtpu: 0.0.40
codegen_flags: <defaults>
</compile_context>

<pallas_src>
import functools

import jax
import jax.numpy as jnp
from jax import lax
from jax.experimental import pallas as pl
from jax.experimental.pallas import tpu as pltpu

NEG_BIG = 1.0e12


def _round_up(n, m):
    return ((n + m - 1) // m) * m


def _pad_to(a, axis, target):
    size = a.shape[axis]
    if size == target:
        return a
    widths = [(0, 0)] * a.ndim
    widths[axis] = (0, target - size)
    return jnp.pad(a, widths)


def _gelu_exact(v):
    # PyTorch nn.GELU() default (erf formulation), evaluated in f32.
    return 0.5 * v * (1.0 + lax.erf(v / jnp.sqrt(2.0).astype(v.dtype)))


def copredictor_kernel(xq_ref, xf_ref, amc_ref, amr_ref, w1_ref, b1_ref,
                       w2_ref, b2_ref, whhr_ref, wh_ref, wtT_ref, wc_ref,
                       out_ref, *, cls_num, dp, tq, tril_mask):
    xq = xq_ref[0]            # [TQ, H]  bf16 (query rows, h head)
    xf = xf_ref[0]            # [Sp, H]  bf16 (all rows, t head)

    # MLP heads (linear + exact GELU); dropout is identity at inference.
    # bf16 MXU operands with f32 accumulation; GELU in f32.
    h = _gelu_exact(jnp.dot(xq, w1_ref[...], preferred_element_type=jnp.float32)
                    + b1_ref[0])                                          # [TQ, D] f32
    t = _gelu_exact(jnp.dot(xf, w2_ref[...], preferred_element_type=jnp.float32)
                    + b2_ref[0])                                          # [Sp, D] f32
    hb = h.astype(jnp.bfloat16)
    tT = t.astype(jnp.bfloat16).T         # [D, Sp] — single transpose, hoisted

    # Bias terms from the appended "1" columns of the biaffine.
    bx = jnp.dot(hb, wh_ref[...], preferred_element_type=jnp.float32)    # [TQ, O]
    byT = (jnp.dot(wtT_ref[...], tT, preferred_element_type=jnp.float32)
           + wc_ref[...])                                                # [O, Sp]

    # All O first-stage contractions fused into one wide, lane-dense MXU matmul.
    core_all = jnp.dot(hb, whhr_ref[...],
                       preferred_element_type=jnp.float32)               # [TQ, O*D]
    core_all = core_all.astype(jnp.bfloat16)

    # Masking (all f32), hoisted out of the class loop into one [TQ, Sp] bias.
    pad = amc_ref[0]                       # [1, Sp]  column (y) validity
    am_row = amr_ref[0]                    # [TQ, 1]  row (x) validity
    mask_bias = -NEG_BIG * ((1.0 - pad) + (1.0 - pad * am_row))          # [TQ, Sp]
    if tril_mask:
        q0 = tq * pl.program_id(1)
        r = q0 + lax.broadcasted_iota(jnp.int32, mask_bias.shape, 0)
        c = lax.broadcasted_iota(jnp.int32, mask_bias.shape, 1)
        mask_bias = mask_bias - NEG_BIG * (r > c).astype(jnp.float32)

    for o in range(cls_num):  # cls_num is small & static -> unrolled
        s = jnp.dot(core_all[:, o * dp:(o + 1) * dp], tT,
                    preferred_element_type=jnp.float32)                   # [TQ, Sp]
        s = s + bx[:, o:o + 1] + byT[o:o + 1, :]
        out_ref[0, o] = s * pad + mask_bias


def copredictor_forward(x, attention_mask, params, *, cls_num, tril_mask=False):
    """x is a tuple/list; x[0] is the [B, S, H] hidden-state tensor (as in torch)."""
    inputs = x[0].astype(jnp.float32)
    B, S, H = inputs.shape
    D = params["w1"].shape[1]

    # Pad seq/biaffine dims to multiples of 128 (lane-dense stores, full MXU
    # tiles).  Padding is zeros / mask=0 and is sliced off at the end.
    Sp = _round_up(S, 128)
    Dp = _round_up(D, 128)
    Hp = _round_up(H, 8)

    # Query-tile size: keeps the (1, O, TQ, Sp) f32 output block small enough
    # for v7x's 64 MiB VMEM and lets both TensorCores pick up tiles.
    if Sp <= 256:
        tq = Sp
    elif Sp % 256 == 0:
        tq = 256
    else:
        tq = 128
    n_q = Sp // tq

    x_p = _pad_to(_pad_to(inputs, 1, Sp), 2, Hp).astype(jnp.bfloat16)    # [B, Sp, Hp]
    am = _pad_to(attention_mask.astype(jnp.float32), 1, Sp)              # [B, Sp]
    am_lane = am.reshape(B, 1, Sp)       # column (y) mask, lane layout
    am_sub = am.reshape(B, Sp, 1)        # row (x) mask, sublane layout

    # Split the (O, D+1, D+1) biaffine weight:
    #   s[o,x,y] = h Whh[o] t^T + (h wh)[x,o] + (wt t^T)[o,y] + wc[o]
    W = params["wb"]                                             # [O, D+1, D+1]
    whh = _pad_to(_pad_to(W[:, :D, :D], 1, Dp), 2, Dp)           # [O, Dp, Dp]
    whh_r = whh.transpose(1, 0, 2).reshape(Dp, cls_num * Dp).astype(jnp.bfloat16)
    wh = _pad_to(jnp.transpose(W[:, :D, D]), 0, Dp).astype(jnp.bfloat16)   # [Dp, O]
    wtT = _pad_to(W[:, D, :D], 1, Dp).astype(jnp.bfloat16)                 # [O, Dp]
    wc = W[:, D, D].reshape(cls_num, 1)                                    # [O, 1] f32

    w1 = _pad_to(_pad_to(params["w1"], 0, Hp), 1, Dp).astype(jnp.bfloat16)
    w2 = _pad_to(_pad_to(params["w2"], 0, Hp), 1, Dp).astype(jnp.bfloat16)
    b1 = _pad_to(params["b1"], 0, Dp).reshape(1, Dp)     # f32
    b2 = _pad_to(params["b2"], 0, Dp).reshape(1, Dp)     # f32

    kernel = functools.partial(copredictor_kernel, cls_num=cls_num, dp=Dp,
                               tq=tq, tril_mask=tril_mask)

    out = pl.pallas_call(
        kernel,
        out_shape=jax.ShapeDtypeStruct((B, cls_num, Sp, Sp), jnp.float32),
        grid_spec=pltpu.PrefetchScalarGridSpec(
            num_scalar_prefetch=0,
            grid=(B, n_q),
            in_specs=[
                pl.BlockSpec((1, tq, Hp), lambda b, q: (b, q, 0)),        # x (query rows)
                pl.BlockSpec((1, Sp, Hp), lambda b, q: (b, 0, 0)),        # x (full, for t)
                pl.BlockSpec((1, 1, Sp), lambda b, q: (b, 0, 0)),         # mask (lane layout)
                pl.BlockSpec((1, tq, 1), lambda b, q: (b, q, 0)),         # mask (sublane layout)
                pl.BlockSpec((Hp, Dp), lambda b, q: (0, 0)),              # W1
                pl.BlockSpec((1, Dp), lambda b, q: (0, 0)),               # b1
                pl.BlockSpec((Hp, Dp), lambda b, q: (0, 0)),              # W2
                pl.BlockSpec((1, Dp), lambda b, q: (0, 0)),               # b2
                pl.BlockSpec((Dp, cls_num * Dp), lambda b, q: (0, 0)),    # biaffine core (fused)
                pl.BlockSpec((Dp, cls_num), lambda b, q: (0, 0)),         # w_h
                pl.BlockSpec((cls_num, Dp), lambda b, q: (0, 0)),         # w_t (transposed)
                pl.BlockSpec((cls_num, 1), lambda b, q: (0, 0)),          # w_c
            ],
            out_specs=pl.BlockSpec((1, cls_num, tq, Sp), lambda b, q: (b, 0, q, 0)),
        ),
        compiler_params=pltpu.CompilerParams(
            dimension_semantics=("parallel", "parallel"),
            vmem_limit_bytes=48 * 1024 * 1024,
        ),
    )(x_p, x_p, am_lane, am_sub, w1, b1, w2, b2, whh_r, wh, wtT, wc)
    return out[:, :, :S, :S]


def reference_forward(x, attention_mask, params, *, cls_num, tril_mask=False):
    """Pure-JAX (f32) mirror of the PyTorch forward, for correctness checking."""
    inputs = x[0].astype(jnp.float32)
    h = _gelu_exact(inputs @ params["w1"] + params["b1"])
    t = _gelu_exact(inputs @ params["w2"] + params["b2"])
    B, S, _ = h.shape
    ones = jnp.ones((B, S, 1), h.dtype)
    hx = jnp.concatenate([h, ones], -1)
    ty = jnp.concatenate([t, ones], -1)
    s = jnp.einsum('bxi,oij,byj->boxy', hx, params["wb"], ty)
    am = attention_mask.astype(jnp.float32)
    pad = jnp.broadcast_to(am[:, None, None, :], s.shape)
    s = s * pad - (1.0 - pad) * NEG_BIG
    attn = 1.0 - am[:, None, None, :] * am[:, None, :, None]
    s = s - attn * NEG_BIG
    if tril_mask:
        tril = jnp.tril(jnp.ones_like(s), k=-1)
        s = s - tril * NEG_BIG
    return s


def init_params(key, hid_size, biaffine_size, cls_num):
    """Deterministic synthetic parameter init (shapes follow the nn.Module)."""
    k1, k2, k3, k4, k5 = jax.random.split(key, 5)
    D = biaffine_size
    lin_bound = 1.0 / jnp.sqrt(hid_size)
    fan_in = (D + 1) * (D + 1)
    fan_out = cls_num * (D + 1)
    xav_std = jnp.sqrt(2.0 / (fan_in + fan_out))
    return {
        "w1": jax.random.uniform(k1, (hid_size, D), jnp.float32, -lin_bound, lin_bound),
        "b1": jax.random.uniform(k2, (D,), jnp.float32, -lin_bound, lin_bound),
        "w2": jax.random.uniform(k3, (hid_size, D), jnp.float32, -lin_bound, lin_bound),
        "b2": jax.random.uniform(k4, (D,), jnp.float32, -lin_bound, lin_bound),
        "wb": xav_std * jax.random.normal(k5, (cls_num, D + 1, D + 1), jnp.float32),
    }


if __name__ == "__main__":
    B, S = 2, 8
    hid_size = 32
    biaffine_size = 32
    cls_num = 4

    key = jax.random.PRNGKey(0)
    kp, kx = jax.random.split(key)
    params = init_params(kp, hid_size, biaffine_size, cls_num)

    inputs = jax.random.normal(kx, (B, S, hid_size), jnp.float32)
    # attention_mask: first sequence fully valid, second has the last 3 padded.
    attention_mask = jnp.array(
        [[1] * S, [1] * (S - 3) + [0] * 3], dtype=jnp.float32)

    x = (inputs,)  # the torch forward does `inputs = x[0]`

    logits = copredictor_forward(x, attention_mask, params, cls_num=cls_num,
                                 tril_mask=False)
    logits = jax.block_until_ready(logits)

    ref = reference_forward(x, attention_mask, params, cls_num=cls_num,
                            tril_mask=False)
    assert logits.shape == (B, cls_num, S, S)
    # bf16 matmul operands with f32 accumulation -> relaxed tolerance vs the f32 ref.
    assert jnp.allclose(logits, ref, rtol=3e-2, atol=3e-2), "mismatch vs reference"

    print("KERNEL_OK")
</pallas_src>

<mosaic_0001>
module attributes {stable_mosaic.version = 11 : i64} {
  func.func @copredictor_kernel(%arg0: i32, %arg1: i32, %arg2: memref<1x128x32xbf16, #tpu.memory_space<vmem>>, %arg3: memref<1x128x32xbf16, #tpu.memory_space<vmem>>, %arg4: memref<1x1x128xf32, #tpu.memory_space<vmem>>, %arg5: memref<1x128x1xf32, #tpu.memory_space<vmem>>, %arg6: memref<32x128xbf16, #tpu.memory_space<vmem>>, %arg7: memref<1x128xf32, #tpu.memory_space<vmem>>, %arg8: memref<32x128xbf16, #tpu.memory_space<vmem>>, %arg9: memref<1x128xf32, #tpu.memory_space<vmem>>, %arg10: memref<128x512xbf16, #tpu.memory_space<vmem>>, %arg11: memref<128x4xbf16, #tpu.memory_space<vmem>>, %arg12: memref<4x128xbf16, #tpu.memory_space<vmem>>, %arg13: memref<4x1xf32, #tpu.memory_space<vmem>>, %arg14: memref<1x4x128x128xf32, #tpu.memory_space<vmem>>) attributes {dimension_semantics = [#tpu.dimension_semantics<parallel>, #tpu.dimension_semantics<parallel>], iteration_bounds = array<i64: 2, 1>, scalar_prefetch = 0 : i64, scratch_operands = 0 : i64, tpu.core_type = #tpu.core_type<tc>, window_params = [{transform_indices = @transform_0, window_bounds = array<i64: 1, 128, 32>}, {transform_indices = @transform_1, window_bounds = array<i64: 1, 128, 32>}, {transform_indices = @transform_2, window_bounds = array<i64: 1, 1, 128>}, {transform_indices = @transform_3, window_bounds = array<i64: 1, 128, 1>}, {pipeline_mode = #tpu.pipeline_mode<synchronous>, transform_indices = @transform_4, window_bounds = array<i64: 32, 128>}, {pipeline_mode = #tpu.pipeline_mode<synchronous>, transform_indices = @transform_5, window_bounds = array<i64: 1, 128>}, {pipeline_mode = #tpu.pipeline_mode<synchronous>, transform_indices = @transform_6, window_bounds = array<i64: 32, 128>}, {pipeline_mode = #tpu.pipeline_mode<synchronous>, transform_indices = @transform_7, window_bounds = array<i64: 1, 128>}, {pipeline_mode = #tpu.pipeline_mode<synchronous>, transform_indices = @transform_8, window_bounds = array<i64: 128, 512>}, {pipeline_mode = #tpu.pipeline_mode<synchronous>, transform_indices = @transform_9, window_bounds = array<i64: 128, 4>}, {pipeline_mode = #tpu.pipeline_mode<synchronous>, transform_indices = @transform_10, window_bounds = array<i64: 4, 128>}, {pipeline_mode = #tpu.pipeline_mode<synchronous>, transform_indices = @transform_11, window_bounds = array<i64: 4, 1>}, {transform_indices = @transform_12, window_bounds = array<i64: 1, 4, 128, 128>}]} {
    %c0 = arith.constant 0 : index
    %c0_0 = arith.constant 0 : index
    %c0_1 = arith.constant 0 : index
    %0 = vector.load %arg2[%c0, %c0_0, %c0_1] : memref<1x128x32xbf16, #tpu.memory_space<vmem>>, vector<1x128x32xbf16>
    %1 = vector.shape_cast %0 : vector<1x128x32xbf16> to vector<128x32xbf16>
    %c0_2 = arith.constant 0 : index
    %c0_3 = arith.constant 0 : index
    %c0_4 = arith.constant 0 : index
    %2 = vector.load %arg3[%c0_2, %c0_3, %c0_4] : memref<1x128x32xbf16, #tpu.memory_space<vmem>>, vector<1x128x32xbf16>
    %3 = vector.shape_cast %2 : vector<1x128x32xbf16> to vector<128x32xbf16>
    %c0_5 = arith.constant 0 : index
    %c0_6 = arith.constant 0 : index
    %4 = vector.load %arg6[%c0_5, %c0_6] : memref<32x128xbf16, #tpu.memory_space<vmem>>, vector<32x128xbf16>
    %cst = arith.constant dense<0.000000e+00> : vector<128x128xf32>
    %5 = tpu.matmul %1, %4, %cst {dimension_numbers = #tpu.dot_dimension_numbers<[1], [0], [0], [1], [0, 0, 1, 1], [], []>} : vector<128x32xbf16>, vector<32x128xbf16>, vector<128x128xf32> -> vector<128x128xf32>
    %c0_7 = arith.constant 0 : index
    %c0_8 = arith.constant 0 : index
    %6 = vector.load %arg7[%c0_7, %c0_8] : memref<1x128xf32, #tpu.memory_space<vmem>>, vector<1x128xf32>
    %7 = vector.shape_cast %6 : vector<1x128xf32> to vector<128xf32>
    %8 = vector.shape_cast %7 : vector<128xf32> to vector<1x128xf32>
    %9 = vector.broadcast %8 : vector<1x128xf32> to vector<128x128xf32>
    %10 = arith.addf %5, %9 : vector<128x128xf32>
    %cst_9 = arith.constant 5.000000e-01 : f32
    %11 = vector.broadcast %cst_9 : f32 to vector<128x128xf32>
    %12 = arith.mulf %11, %10 : vector<128x128xf32>
    %cst_10 = arith.constant 2.000000e+00 : f32
    %13 = math.sqrt %cst_10 : f32
    %14 = vector.broadcast %13 : f32 to vector<128x128xf32>
    %15 = arith.divf %10, %14 : vector<128x128xf32>
    %16 = math.erf %15 : vector<128x128xf32>
    %cst_11 = arith.constant 1.000000e+00 : f32
    %17 = vector.broadcast %cst_11 : f32 to vector<128x128xf32>
    %18 = arith.addf %17, %16 : vector<128x128xf32>
    %19 = arith.mulf %12, %18 : vector<128x128xf32>
    %c0_12 = arith.constant 0 : index
    %c0_13 = arith.constant 0 : index
    %20 = vector.load %arg8[%c0_12, %c0_13] : memref<32x128xbf16, #tpu.memory_space<vmem>>, vector<32x128xbf16>
    %cst_14 = arith.constant dense<0.000000e+00> : vector<128x128xf32>
    %21 = tpu.matmul %3, %20, %cst_14 {dimension_numbers = #tpu.dot_dimension_numbers<[1], [0], [0], [1], [0, 0, 1, 1], [], []>} : vector<128x32xbf16>, vector<32x128xbf16>, vector<128x128xf32> -> vector<128x128xf32>
    %c0_15 = arith.constant 0 : index
    %c0_16 = arith.constant 0 : index
    %22 = vector.load %arg9[%c0_15, %c0_16] : memref<1x128xf32, #tpu.memory_space<vmem>>, vector<1x128xf32>
    %23 = vector.shape_cast %22 : vector<1x128xf32> to vector<128xf32>
    %24 = vector.shape_cast %23 : vector<128xf32> to vector<1x128xf32>
    %25 = vector.broadcast %24 : vector<1x128xf32> to vector<128x128xf32>
    %26 = arith.addf %21, %25 : vector<128x128xf32>
    %cst_17 = arith.constant 5.000000e-01 : f32
    %27 = vector.broadcast %cst_17 : f32 to vector<128x128xf32>
    %28 = arith.mulf %27, %26 : vector<128x128xf32>
    %cst_18 = arith.constant 2.000000e+00 : f32
    %29 = math.sqrt %cst_18 : f32
    %30 = vector.broadcast %29 : f32 to vector<128x128xf32>
    %31 = arith.divf %26, %30 : vector<128x128xf32>
    %32 = math.erf %31 : vector<128x128xf32>
    %cst_19 = arith.constant 1.000000e+00 : f32
    %33 = vector.broadcast %cst_19 : f32 to vector<128x128xf32>
    %34 = arith.addf %33, %32 : vector<128x128xf32>
    %35 = arith.mulf %28, %34 : vector<128x128xf32>
    %36 = arith.truncf %19 : vector<128x128xf32> to vector<128x128xbf16>
    %37 = arith.truncf %35 : vector<128x128xf32> to vector<128x128xbf16>
    %38 = tpu.transpose %37, [1, 0] : vector<128x128xbf16> -> vector<128x128xbf16>
    %c0_20 = arith.constant 0 : index
    %c0_21 = arith.constant 0 : index
    %39 = vector.load %arg11[%c0_20, %c0_21] : memref<128x4xbf16, #tpu.memory_space<vmem>>, vector<128x4xbf16>
    %cst_22 = arith.constant dense<0.000000e+00> : vector<128x4xf32>
    %40 = tpu.matmul %36, %39, %cst_22 {dimension_numbers = #tpu.dot_dimension_numbers<[1], [0], [0], [1], [0, 0, 1, 1], [], []>} : vector<128x128xbf16>, vector<128x4xbf16>, vector<128x4xf32> -> vector<128x4xf32>
    %c0_23 = arith.constant 0 : index
    %c0_24 = arith.constant 0 : index
    %41 = vector.load %arg12[%c0_23, %c0_24] : memref<4x128xbf16, #tpu.memory_space<vmem>>, vector<4x128xbf16>
    %cst_25 = arith.constant dense<0.000000e+00> : vector<4x128xf32>
    %42 = tpu.matmul %41, %38, %cst_25 {dimension_numbers = #tpu.dot_dimension_numbers<[1], [0], [0], [1], [0, 0, 1, 1], [], []>} : vector<4x128xbf16>, vector<128x128xbf16>, vector<4x128xf32> -> vector<4x128xf32>
    %c0_26 = arith.constant 0 : index
    %c0_27 = arith.constant 0 : index
    %43 = vector.load %arg13[%c0_26, %c0_27] : memref<4x1xf32, #tpu.memory_space<vmem>>, vector<4x1xf32>
    %44 = vector.broadcast %43 : vector<4x1xf32> to vector<4x128xf32>
    %45 = arith.addf %42, %44 : vector<4x128xf32>
    %c0_28 = arith.constant 0 : index
    %c0_29 = arith.constant 0 : index
    %46 = vector.load %arg10[%c0_28, %c0_29] : memref<128x512xbf16, #tpu.memory_space<vmem>>, vector<128x512xbf16>
    %cst_30 = arith.constant dense<0.000000e+00> : vector<128x512xf32>
    %47 = tpu.matmul %36, %46, %cst_30 {dimension_numbers = #tpu.dot_dimension_numbers<[1], [0], [0], [1], [0, 0, 1, 1], [], []>} : vector<128x128xbf16>, vector<128x512xbf16>, vector<128x512xf32> -> vector<128x512xf32>
    %48 = arith.truncf %47 : vector<128x512xf32> to vector<128x512xbf16>
    %c0_31 = arith.constant 0 : index
    %c0_32 = arith.constant 0 : index
    %c0_33 = arith.constant 0 : index
    %49 = vector.load %arg4[%c0_31, %c0_32, %c0_33] : memref<1x1x128xf32, #tpu.memory_space<vmem>>, vector<1x1x128xf32>
    %50 = vector.shape_cast %49 : vector<1x1x128xf32> to vector<1x128xf32>
    %c0_34 = arith.constant 0 : index
    %c0_35 = arith.constant 0 : index
    %c0_36 = arith.constant 0 : index
    %51 = vector.load %arg5[%c0_34, %c0_35, %c0_36] : memref<1x128x1xf32, #tpu.memory_space<vmem>>, vector<1x128x1xf32>
    %52 = vector.shape_cast %51 : vector<1x128x1xf32> to vector<128x1xf32>
    %cst_37 = arith.constant 1.000000e+00 : f32
    %53 = vector.broadcast %cst_37 : f32 to vector<1x128xf32>
    %54 = arith.subf %53, %50 : vector<1x128xf32>
    %55 = vector.broadcast %50 : vector<1x128xf32> to vector<128x128xf32>
    %56 = vector.broadcast %52 : vector<128x1xf32> to vector<128x128xf32>
    %57 = arith.mulf %55, %56 : vector<128x128xf32>
    %cst_38 = arith.constant 1.000000e+00 : f32
    %58 = vector.broadcast %cst_38 : f32 to vector<128x128xf32>
    %59 = arith.subf %58, %57 : vector<128x128xf32>
    %60 = vector.broadcast %54 : vector<1x128xf32> to vector<128x128xf32>
    %61 = arith.addf %60, %59 : vector<128x128xf32>
    %cst_39 = arith.constant -9.99999995E+11 : f32
    %62 = vector.broadcast %cst_39 : f32 to vector<128x128xf32>
    %63 = arith.mulf %62, %61 : vector<128x128xf32>
    %64 = vector.extract_strided_slice %48 {offsets = [0, 0], sizes = [128, 128], strides = [1, 1]} : vector<128x512xbf16> to vector<128x128xbf16>
    %cst_40 = arith.constant dense<0.000000e+00> : vector<128x128xf32>
    %65 = tpu.matmul %64, %38, %cst_40 {dimension_numbers = #tpu.dot_dimension_numbers<[1], [0], [0], [1], [0, 0, 1, 1], [], []>} : vector<128x128xbf16>, vector<128x128xbf16>, vector<128x128xf32> -> vector<128x128xf32>
    %66 = vector.extract_strided_slice %40 {offsets = [0, 0], sizes = [128, 1], strides = [1, 1]} : vector<128x4xf32> to vector<128x1xf32>
    %67 = vector.broadcast %66 : vector<128x1xf32> to vector<128x128xf32>
    %68 = arith.addf %65, %67 : vector<128x128xf32>
    %69 = vector.extract_strided_slice %45 {offsets = [0, 0], sizes = [1, 128], strides = [1, 1]} : vector<4x128xf32> to vector<1x128xf32>
    %70 = vector.broadcast %69 : vector<1x128xf32> to vector<128x128xf32>
    %71 = arith.addf %68, %70 : vector<128x128xf32>
    %72 = vector.broadcast %50 : vector<1x128xf32> to vector<128x128xf32>
    %73 = arith.mulf %71, %72 : vector<128x128xf32>
    %74 = arith.addf %73, %63 : vector<128x128xf32>
    %c0_41 = arith.constant 0 : index
    %c0_42 = arith.constant 0 : index
    %c0_43 = arith.constant 0 : index
    %c0_44 = arith.constant 0 : index
    %75 = vector.load %arg14[%c0_41, %c0_42, %c0_43, %c0_44] : memref<1x4x128x128xf32, #tpu.memory_space<vmem>>, vector<1x1x128x128xf32>
    %76 = vector.shape_cast %75 : vector<1x1x128x128xf32> to vector<128x128xf32>
    %77 = vector.shape_cast %74 : vector<128x128xf32> to vector<1x1x128x128xf32>
    tpu.vector_store %arg14[%c0_41, %c0_42, %c0_43, %c0_44], %77 {strides = array<i32>} : memref<1x4x128x128xf32, #tpu.memory_space<vmem>>, vector<1x1x128x128xf32>,
    %78 = vector.extract_strided_slice %48 {offsets = [0, 128], sizes = [128, 128], strides = [1, 1]} : vector<128x512xbf16> to vector<128x128xbf16>
    %cst_45 = arith.constant dense<0.000000e+00> : vector<128x128xf32>
    %79 = tpu.matmul %78, %38, %cst_45 {dimension_numbers = #tpu.dot_dimension_numbers<[1], [0], [0], [1], [0, 0, 1, 1], [], []>} : vector<128x128xbf16>, vector<128x128xbf16>, vector<128x128xf32> -> vector<128x128xf32>
    %80 = vector.extract_strided_slice %40 {offsets = [0, 1], sizes = [128, 1], strides = [1, 1]} : vector<128x4xf32> to vector<128x1xf32>
    %81 = vector.broadcast %80 : vector<128x1xf32> to vector<128x128xf32>
    %82 = arith.addf %79, %81 : vector<128x128xf32>
    %83 = vector.extract_strided_slice %45 {offsets = [1, 0], sizes = [1, 128], strides = [1, 1]} : vector<4x128xf32> to vector<1x128xf32>
    %84 = vector.broadcast %83 : vector<1x128xf32> to vector<128x128xf32>
    %85 = arith.addf %82, %84 : vector<128x128xf32>
    %86 = vector.broadcast %50 : vector<1x128xf32> to vector<128x128xf32>
    %87 = arith.mulf %85, %86 : vector<128x128xf32>
    %88 = arith.addf %87, %63 : vector<128x128xf32>
    %c0_46 = arith.constant 0 : index
    %c1 = arith.constant 1 : index
    %c0_47 = arith.constant 0 : index
    %c0_48 = arith.constant 0 : index
    %89 = vector.load %arg14[%c0_46, %c1, %c0_47, %c0_48] : memref<1x4x128x128xf32, #tpu.memory_space<vmem>>, vector<1x1x128x128xf32>
    %90 = vector.shape_cast %89 : vector<1x1x128x128xf32> to vector<128x128xf32>
    %91 = vector.shape_cast %88 : vector<128x128xf32> to vector<1x1x128x128xf32>
    tpu.vector_store %arg14[%c0_46, %c1, %c0_47, %c0_48], %91 {strides = array<i32>} : memref<1x4x128x128xf32, #tpu.memory_space<vmem>>, vector<1x1x128x128xf32>,
    %92 = vector.extract_strided_slice %48 {offsets = [0, 256], sizes = [128, 128], strides = [1, 1]} : vector<128x512xbf16> to vector<128x128xbf16>
    %cst_49 = arith.constant dense<0.000000e+00> : vector<128x128xf32>
    %93 = tpu.matmul %92, %38, %cst_49 {dimension_numbers = #tpu.dot_dimension_numbers<[1], [0], [0], [1], [0, 0, 1, 1], [], []>} : vector<128x128xbf16>, vector<128x128xbf16>, vector<128x128xf32> -> vector<128x128xf32>
    %94 = vector.extract_strided_slice %40 {offsets = [0, 2], sizes = [128, 1], strides = [1, 1]} : vector<128x4xf32> to vector<128x1xf32>
    %95 = vector.broadcast %94 : vector<128x1xf32> to vector<128x128xf32>
    %96 = arith.addf %93, %95 : vector<128x128xf32>
    %97 = vector.extract_strided_slice %45 {offsets = [2, 0], sizes = [1, 128], strides = [1, 1]} : vector<4x128xf32> to vector<1x128xf32>
    %98 = vector.broadcast %97 : vector<1x128xf32> to vector<128x128xf32>
    %99 = arith.addf %96, %98 : vector<128x128xf32>
    %100 = vector.broadcast %50 : vector<1x128xf32> to vector<128x128xf32>
    %101 = arith.mulf %99, %100 : vector<128x128xf32>
    %102 = arith.addf %101, %63 : vector<128x128xf32>
    %c0_50 = arith.constant 0 : index
    %c2 = arith.constant 2 : index
    %c0_51 = arith.constant 0 : index
    %c0_52 = arith.constant 0 : index
    %103 = vector.load %arg14[%c0_50, %c2, %c0_51, %c0_52] : memref<1x4x128x128xf32, #tpu.memory_space<vmem>>, vector<1x1x128x128xf32>
    %104 = vector.shape_cast %103 : vector<1x1x128x128xf32> to vector<128x128xf32>
    %105 = vector.shape_cast %102 : vector<128x128xf32> to vector<1x1x128x128xf32>
    tpu.vector_store %arg14[%c0_50, %c2, %c0_51, %c0_52], %105 {strides = array<i32>} : memref<1x4x128x128xf32, #tpu.memory_space<vmem>>, vector<1x1x128x128xf32>,
    %106 = vector.extract_strided_slice %48 {offsets = [0, 384], sizes = [128, 128], strides = [1, 1]} : vector<128x512xbf16> to vector<128x128xbf16>
    %cst_53 = arith.constant dense<0.000000e+00> : vector<128x128xf32>
    %107 = tpu.matmul %106, %38, %cst_53 {dimension_numbers = #tpu.dot_dimension_numbers<[1], [0], [0], [1], [0, 0, 1, 1], [], []>} : vector<128x128xbf16>, vector<128x128xbf16>, vector<128x128xf32> -> vector<128x128xf32>
    %108 = vector.extract_strided_slice %40 {offsets = [0, 3], sizes = [128, 1], strides = [1, 1]} : vector<128x4xf32> to vector<128x1xf32>
    %109 = vector.broadcast %108 : vector<128x1xf32> to vector<128x128xf32>
    %110 = arith.addf %107, %109 : vector<128x128xf32>
    %111 = vector.extract_strided_slice %45 {offsets = [3, 0], sizes = [1, 128], strides = [1, 1]} : vector<4x128xf32> to vector<1x128xf32>
    %112 = vector.broadcast %111 : vector<1x128xf32> to vector<128x128xf32>
    %113 = arith.addf %110, %112 : vector<128x128xf32>
    %114 = vector.broadcast %50 : vector<1x128xf32> to vector<128x128xf32>
    %115 = arith.mulf %113, %114 : vector<128x128xf32>
    %116 = arith.addf %115, %63 : vector<128x128xf32>
    %c0_54 = arith.constant 0 : index
    %c3 = arith.constant 3 : index
    %c0_55 = arith.constant 0 : index
    %c0_56 = arith.constant 0 : index
    %117 = vector.load %arg14[%c0_54, %c3, %c0_55, %c0_56] : memref<1x4x128x128xf32, #tpu.memory_space<vmem>>, vector<1x1x128x128xf32>
    %118 = vector.shape_cast %117 : vector<1x1x128x128xf32> to vector<128x128xf32>
    %119 = vector.shape_cast %116 : vector<128x128xf32> to vector<1x1x128x128xf32>
    tpu.vector_store %arg14[%c0_54, %c3, %c0_55, %c0_56], %119 {strides = array<i32>} : memref<1x4x128x128xf32, #tpu.memory_space<vmem>>, vector<1x1x128x128xf32>,
    return
  }
  func.func @transform_0(%arg0: i32, %arg1: i32) -> (i32, i32, i32) {
    %c0_i32 = arith.constant 0 : i32
    %c0_i32_0 = arith.constant 0 : i32
    return %arg0, %arg1, %c0_i32 : i32, i32, i32
  }
  func.func @transform_1(%arg0: i32, %arg1: i32) -> (i32, i32, i32) {
    %c0_i32 = arith.constant 0 : i32
    %c0_i32_0 = arith.constant 0 : i32
    %c0_i32_1 = arith.constant 0 : i32
    return %arg0, %c0_i32, %c0_i32_0 : i32, i32, i32
  }
  func.func @transform_2(%arg0: i32, %arg1: i32) -> (i32, i32, i32) {
    %c0_i32 = arith.constant 0 : i32
    %c0_i32_0 = arith.constant 0 : i32
    %c0_i32_1 = arith.constant 0 : i32
    return %arg0, %c0_i32, %c0_i32_0 : i32, i32, i32
  }
  func.func @transform_3(%arg0: i32, %arg1: i32) -> (i32, i32, i32) {
    %c0_i32 = arith.constant 0 : i32
    %c0_i32_0 = arith.constant 0 : i32
    return %arg0, %arg1, %c0_i32 : i32, i32, i32
  }
  func.func @transform_4(%arg0: i32, %arg1: i32) -> (i32, i32) {
    %c0_i32 = arith.constant 0 : i32
    %c0_i32_0 = arith.constant 0 : i32
    %c0_i32_1 = arith.constant 0 : i32
    return %c0_i32, %c0_i32_0 : i32, i32
  }
  func.func @transform_5(%arg0: i32, %arg1: i32) -> (i32, i32) {
    %c0_i32 = arith.constant 0 : i32
    %c0_i32_0 = arith.constant 0 : i32
    %c0_i32_1 = arith.constant 0 : i32
    return %c0_i32, %c0_i32_0 : i32, i32
  }
  func.func @transform_6(%arg0: i32, %arg1: i32) -> (i32, i32) {
    %c0_i32 = arith.constant 0 : i32
    %c0_i32_0 = arith.constant 0 : i32
    %c0_i32_1 = arith.constant 0 : i32
    return %c0_i32, %c0_i32_0 : i32, i32
  }
  func.func @transform_7(%arg0: i32, %arg1: i32) -> (i32, i32) {
    %c0_i32 = arith.constant 0 : i32
    %c0_i32_0 = arith.constant 0 : i32
    %c0_i32_1 = arith.constant 0 : i32
    return %c0_i32, %c0_i32_0 : i32, i32
  }
  func.func @transform_8(%arg0: i32, %arg1: i32) -> (i32, i32) {
    %c0_i32 = arith.constant 0 : i32
    %c0_i32_0 = arith.constant 0 : i32
    %c0_i32_1 = arith.constant 0 : i32
    return %c0_i32, %c0_i32_0 : i32, i32
  }
  func.func @transform_9(%arg0: i32, %arg1: i32) -> (i32, i32) {
    %c0_i32 = arith.constant 0 : i32
    %c0_i32_0 = arith.constant 0 : i32
    %c0_i32_1 = arith.constant 0 : i32
    return %c0_i32, %c0_i32_0 : i32, i32
  }
  func.func @transform_10(%arg0: i32, %arg1: i32) -> (i32, i32) {
    %c0_i32 = arith.constant 0 : i32
    %c0_i32_0 = arith.constant 0 : i32
    %c0_i32_1 = arith.constant 0 : i32
    return %c0_i32, %c0_i32_0 : i32, i32
  }
  func.func @transform_11(%arg0: i32, %arg1: i32) -> (i32, i32) {
    %c0_i32 = arith.constant 0 : i32
    %c0_i32_0 = arith.constant 0 : i32
    %c0_i32_1 = arith.constant 0 : i32
    return %c0_i32, %c0_i32_0 : i32, i32
  }
  func.func @transform_12(%arg0: i32, %arg1: i32) -> (i32, i32, i32, i32) {
    %c0_i32 = arith.constant 0 : i32
    %c0_i32_0 = arith.constant 0 : i32
    %c0_i32_1 = arith.constant 0 : i32
    return %arg0, %c0_i32, %arg1, %c0_i32_0 : i32, i32, i32, i32
  }
}

</mosaic_0001>

<llo_original>
// kernel: tpu_custom_call.1
$region0: #{tpu_custom_call.1}
  #allocation0 [shape = 'u32[]', space=smem, size = 0x4, offset = 0x4, fixed_abs, tag = 'smem constant byte address 0x4 - core index']
  #allocation1 [shape = 'u32[144,128]{1,0:T(1,128)}', space=vmem, size = 0x12000, scoped, tag = 'internal scratch']
  %s0 = inlined_call_operand.vmem [shape: bf16[2,128,32], index: 0, kind: input, shape index: {}]
  %s1 = inlined_call_operand.vmem [shape: bf16[2,128,32], index: 1, kind: input, shape index: {}]
  %s2 = inlined_call_operand.vmem [shape: f32[2,1,128], index: 2, kind: input, shape index: {}]
  %s3 = inlined_call_operand.vmem [shape: f32[2,128,1], index: 3, kind: input, shape index: {}]
  %s4 = inlined_call_operand.vmem [shape: bf16[32,128], index: 4, kind: input, shape index: {}]
  %s5 = inlined_call_operand.vmem [shape: f32[1,128], index: 5, kind: input, shape index: {}]
  %s6 = inlined_call_operand.vmem [shape: bf16[32,128], index: 6, kind: input, shape index: {}]
  %s7 = inlined_call_operand.vmem [shape: f32[1,128], index: 7, kind: input, shape index: {}]
  %s8 = inlined_call_operand.vmem [shape: bf16[128,512], index: 8, kind: input, shape index: {}]
  %s9 = inlined_call_operand.vmem [shape: bf16[128,4], index: 9, kind: input, shape index: {}]
  %s10 = inlined_call_operand.vmem [shape: bf16[4,128], index: 10, kind: input, shape index: {}]
  %s11 = inlined_call_operand.vmem [shape: f32[4,1], index: 11, kind: input, shape index: {}]
  %s12 = inlined_call_operand.hbm [shape: f32[2,4,128,128], index: 12, kind: output, shape index: {}]
  %s13 = sld [smem:[#allocation0]]
  $region81: #{tpu_custom_call.1} parent=0
    _
  %s15 = ssub.s32 1, %s13
  %s16 = scalar_select 0, %s15, %s13
  $region1: #{tpu_custom_call.1} parent=0
    #allocation2 [shape = 'u8[524288]{0}', space=vmem, size = 0x80000, scoped, tag = 'output window, operand 0']
    #allocation3 [shape = 's32[2]{0}', space=sflag, size = 0x8, scoped, tag = 'scoped memory for tpu_custom_call.1']
    %17 = vsyncpa [#allocation3], 0
    %s18 = scalar_lea.sflag [#allocation3], 1
    %19 = vsyncpa %s18, 0
    loop: start=0, step=1, limit=4
    $region2: #{tpu_custom_call.1} parent=1 // loop_pre_header
      _
    $region3: #{tpu_custom_call.1} parent=1 // loop_header
      %s21 = sphi 0, %s25
      %p22 = scmp.ge.s32.totalorder %s21, 4
      %s28 = sphi 0, %s40
      %s29 = sphi 0, %s36
      %s30 = sphi 0, %s28
      %s31 = sphi 0, %s29
      %s32 = sphi 0, %s30
      %s33 = sphi 0, %s31
      %s45 = sphi 0, %s47
      %s48 = sphi 0, %s45
      %s49 = sphi 0, %s48
      %s65 = sphi 0, %s49
      %s71 = sphi 0, %s73
      %s74 = sphi 0, %s71
      %s75 = sphi 0, %s74
      %s91 = sphi 0, %s75
      %s97 = sphi 0, %s99
      %s100 = sphi 0, %s97
      %s101 = sphi 0, %s100
      %s117 = sphi 0, %s101
      %s125 = sphi 0, %s127
      %s128 = sphi 0, %s125
      %s129 = sphi 0, %s128
      %s145 = sphi 0, %s129
      %s149 = sphi 0, %s149
      %s151 = sphi 0, %s149
      %s152 = sphi 0, %s151
      %s166 = sphi 0, %s152
      %s170 = sphi 0, %s170
      %s172 = sphi 0, %s170
      %s173 = sphi 0, %s172
      %s187 = sphi 0, %s173
      %s191 = sphi 0, %s191
      %s193 = sphi 0, %s191
      %s194 = sphi 0, %s193
      %s208 = sphi 0, %s194
      %s212 = sphi 0, %s212
      %s214 = sphi 0, %s212
      %s215 = sphi 0, %s214
      %s229 = sphi 0, %s215
      %s233 = sphi 0, %s233
      %s235 = sphi 0, %s233
      %s236 = sphi 0, %s235
      %s250 = sphi 0, %s236
      %s254 = sphi 0, %s254
      %s256 = sphi 0, %s254
      %s257 = sphi 0, %s256
      %s271 = sphi 0, %s257
      %s275 = sphi 0, %s275
      %s277 = sphi 0, %s275
      %s278 = sphi 0, %s277
      %s292 = sphi 0, %s278
      %s296 = sphi 0, %s296
      %s298 = sphi 0, %s296
      %s299 = sphi 0, %s298
      %s313 = sphi 0, %s299
      %s321 = sphi 0, %s323
      %s324 = sphi 0, %s321
      %s325 = sphi 0, %s324
      %s341 = sphi 0, %s325
    $region4: #{tpu_custom_call.1} parent=1 // loop_header_branch
      %24 = sbr.rel (%p22) target = $region8
    $region5: #{tpu_custom_call.1} parent=1 // loop_body
      %s26 = ssub.s32 %s21, 1
      %s27 = ssub.s32 %s21, 2
      %s34 = sadd.s32 1, %s29
      %p35 = scmp.ge.s32.totalorder %s34, 1
      %s36 = scalar_select %p35, 0, %s34
      %s37 = sadd.s32 1, %s28
      %s38 = scalar_select %p35, %s37, %s28
      %p39 = scmp.ge.s32.totalorder %s38, 2
      %s40 = scalar_select %p39, 0, %s38
      %s41 = ssub.s32 %s28, %s40
      %s42 = ssub.s32 %s29, %s36
      %s43 = sor.u32 %s41, %s42
      %p44 = scmp.eq.s32.totalorder %s43, 0
      %s46 = sadd.s32 %s45, 1
      %s47 = scalar_select %p44, %s45, %s46
      %p50 = pneg %p44
      %p51 = scmp.eq.s32.totalorder %s21, 1
      %p52 = por %p50, %p51
      %p53 = scmp.ne.s32.totalorder %s45, %s48
      %p54 = scmp.eq.s32.totalorder %s21, 0
      %p55 = por %p53, %p54
      %p56 = scmp.ne.s32.totalorder %s45, %s48
      %p57 = scmp.eq.s32.totalorder %s26, 1
      %p58 = por %p56, %p57
      %p59 = scmp.ne.s32.totalorder %s48, %s49
      %p60 = scmp.eq.s32.totalorder %s26, 0
      %p61 = por %p59, %p60
      %p62 = scmp.ne.s32.totalorder %s48, %s49
      %p63 = scmp.eq.s32.totalorder %s27, 1
      %p64 = por %p62, %p63
      %p66 = scmp.ne.s32.totalorder %s49, %s65
      %p67 = scmp.eq.s32.totalorder %s27, 0
      %p68 = por %p66, %p67
      %s69 = ssub.s32 %s28, %s40
      %p70 = scmp.eq.s32.totalorder %s69, 0
      %s72 = sadd.s32 %s71, 1
      %s73 = scalar_select %p70, %s71, %s72
      %p76 = pneg %p70
      %p77 = scmp.eq.s32.totalorder %s21, 1
      %p78 = por %p76, %p77
      %p79 = scmp.ne.s32.totalorder %s71, %s74
      %p80 = scmp.eq.s32.totalorder %s21, 0
      %p81 = por %p79, %p80
      %p82 = scmp.ne.s32.totalorder %s71, %s74
      %p83 = scmp.eq.s32.totalorder %s26, 1
      %p84 = por %p82, %p83
      %p85 = scmp.ne.s32.totalorder %s74, %s75
      %p86 = scmp.eq.s32.totalorder %s26, 0
      %p87 = por %p85, %p86
      %p88 = scmp.ne.s32.totalorder %s74, %s75
      %p89 = scmp.eq.s32.totalorder %s27, 1
      %p90 = por %p88, %p89
      %p92 = scmp.ne.s32.totalorder %s75, %s91
      %p93 = scmp.eq.s32.totalorder %s27, 0
      %p94 = por %p92, %p93
      %s95 = ssub.s32 %s28, %s40
      %p96 = scmp.eq.s32.totalorder %s95, 0
      %s98 = sadd.s32 %s97, 1
      %s99 = scalar_select %p96, %s97, %s98
      %p102 = pneg %p96
      %p103 = scmp.eq.s32.totalorder %s21, 1
      %p104 = por %p102, %p103
      %p105 = scmp.ne.s32.totalorder %s97, %s100
      %p106 = scmp.eq.s32.totalorder %s21, 0
      %p107 = por %p105, %p106
      %p108 = scmp.ne.s32.totalorder %s97, %s100
      %p109 = scmp.eq.s32.totalorder %s26, 1
      %p110 = por %p108, %p109
      %p111 = scmp.ne.s32.totalorder %s100, %s101
      %p112 = scmp.eq.s32.totalorder %s26, 0
      %p113 = por %p111, %p112
      %p114 = scmp.ne.s32.totalorder %s100, %s101
      %p115 = scmp.eq.s32.totalorder %s27, 1
      %p116 = por %p114, %p115
      %p118 = scmp.ne.s32.totalorder %s101, %s117
      %p119 = scmp.eq.s32.totalorder %s27, 0
      %p120 = por %p118, %p119
      %s121 = ssub.s32 %s28, %s40
      %s122 = ssub.s32 %s29, %s36
      %s123 = sor.u32 %s121, %s122
      %p124 = scmp.eq.s32.totalorder %s123, 0
      %s126 = sadd.s32 %s125, 1
      %s127 = scalar_select %p124, %s125, %s126
      %p130 = pneg %p124
      %p131 = scmp.eq.s32.totalorder %s21, 1
      %p132 = por %p130, %p131
      %p133 = scmp.ne.s32.totalorder %s125, %s128
      %p134 = scmp.eq.s32.totalorder %s21, 0
      %p135 = por %p133, %p134
      %p136 = scmp.ne.s32.totalorder %s125, %s128
      %p137 = scmp.eq.s32.totalorder %s26, 1
      %p138 = por %p136, %p137
      %p139 = scmp.ne.s32.totalorder %s128, %s129
      %p140 = scmp.eq.s32.totalorder %s26, 0
      %p141 = por %p139, %p140
      %p142 = scmp.ne.s32.totalorder %s128, %s129
      %p143 = scmp.eq.s32.totalorder %s27, 1
      %p144 = por %p142, %p143
      %p146 = scmp.ne.s32.totalorder %s129, %s145
      %p147 = scmp.eq.s32.totalorder %s27, 0
      %p148 = por %p146, %p147
      %s150 = sadd.s32 %s149, 1
      %p153 = scmp.eq.s32.totalorder %s21, 1
      %p154 = scmp.ne.s32.totalorder %s149, %s151
      %p155 = scmp.eq.s32.totalorder %s21, 0
      %p156 = por %p154, %p155
      %p157 = scmp.ne.s32.totalorder %s149, %s151
      %p158 = scmp.eq.s32.totalorder %s26, 1
      %p159 = por %p157, %p158
      %p160 = scmp.ne.s32.totalorder %s151, %s152
      %p161 = scmp.eq.s32.totalorder %s26, 0
      %p162 = por %p160, %p161
      %p163 = scmp.ne.s32.totalorder %s151, %s152
      %p164 = scmp.eq.s32.totalorder %s27, 1
      %p165 = por %p163, %p164
      %p167 = scmp.ne.s32.totalorder %s152, %s166
      %p168 = scmp.eq.s32.totalorder %s27, 0
      %p169 = por %p167, %p168
      %s171 = sadd.s32 %s170, 1
      %p174 = scmp.eq.s32.totalorder %s21, 1
      %p175 = scmp.ne.s32.totalorder %s170, %s172
      %p176 = scmp.eq.s32.totalorder %s21, 0
      %p177 = por %p175, %p176
      %p178 = scmp.ne.s32.totalorder %s170, %s172
      %p179 = scmp.eq.s32.totalorder %s26, 1
      %p180 = por %p178, %p179
      %p181 = scmp.ne.s32.totalorder %s172, %s173
      %p182 = scmp.eq.s32.totalorder %s26, 0
      %p183 = por %p181, %p182
      %p184 = scmp.ne.s32.totalorder %s172, %s173
      %p185 = scmp.eq.s32.totalorder %s27, 1
      %p186 = por %p184, %p185
      %p188 = scmp.ne.s32.totalorder %s173, %s187
      %p189 = scmp.eq.s32.totalorder %s27, 0
      %p190 = por %p188, %p189
      %s192 = sadd.s32 %s191, 1
      %p195 = scmp.eq.s32.totalorder %s21, 1
      %p196 = scmp.ne.s32.totalorder %s191, %s193
      %p197 = scmp.eq.s32.totalorder %s21, 0
      %p198 = por %p196, %p197
      %p199 = scmp.ne.s32.totalorder %s191, %s193
      %p200 = scmp.eq.s32.totalorder %s26, 1
      %p201 = por %p199, %p200
      %p202 = scmp.ne.s32.totalorder %s193, %s194
      %p203 = scmp.eq.s32.totalorder %s26, 0
      %p204 = por %p202, %p203
      %p205 = scmp.ne.s32.totalorder %s193, %s194
      %p206 = scmp.eq.s32.totalorder %s27, 1
      %p207 = por %p205, %p206
      %p209 = scmp.ne.s32.totalorder %s194, %s208
      %p210 = scmp.eq.s32.totalorder %s27, 0
      %p211 = por %p209, %p210
      %s213 = sadd.s32 %s212, 1
      %p216 = scmp.eq.s32.totalorder %s21, 1
      %p217 = scmp.ne.s32.totalorder %s212, %s214
      %p218 = scmp.eq.s32.totalorder %s21, 0
      %p219 = por %p217, %p218
      %p220 = scmp.ne.s32.totalorder %s212, %s214
      %p221 = scmp.eq.s32.totalorder %s26, 1
      %p222 = por %p220, %p221
      %p223 = scmp.ne.s32.totalorder %s214, %s215
      %p224 = scmp.eq.s32.totalorder %s26, 0
      %p225 = por %p223, %p224
      %p226 = scmp.ne.s32.totalorder %s214, %s215
      %p227 = scmp.eq.s32.totalorder %s27, 1
      %p228 = por %p226, %p227
      %p230 = scmp.ne.s32.totalorder %s215, %s229
      %p231 = scmp.eq.s32.totalorder %s27, 0
      %p232 = por %p230, %p231
      %s234 = sadd.s32 %s233, 1
      %p237 = scmp.eq.s32.totalorder %s21, 1
      %p238 = scmp.ne.s32.totalorder %s233, %s235
      %p239 = scmp.eq.s32.totalorder %s21, 0
      %p240 = por %p238, %p239
      %p241 = scmp.ne.s32.totalorder %s233, %s235
      %p242 = scmp.eq.s32.totalorder %s26, 1
      %p243 = por %p241, %p242
      %p244 = scmp.ne.s32.totalorder %s235, %s236
      %p245 = scmp.eq.s32.totalorder %s26, 0
      %p246 = por %p244, %p245
      %p247 = scmp.ne.s32.totalorder %s235, %s236
      %p248 = scmp.eq.s32.totalorder %s27, 1
      %p249 = por %p247, %p248
      %p251 = scmp.ne.s32.totalorder %s236, %s250
      %p252 = scmp.eq.s32.totalorder %s27, 0
      %p253 = por %p251, %p252
      %s255 = sadd.s32 %s254, 1
      %p258 = scmp.eq.s32.totalorder %s21, 1
      %p259 = scmp.ne.s32.totalorder %s254, %s256
      %p260 = scmp.eq.s32.totalorder %s21, 0
      %p261 = por %p259, %p260
      %p262 = scmp.ne.s32.totalorder %s254, %s256
      %p263 = scmp.eq.s32.totalorder %s26, 1
      %p264 = por %p262, %p263
      %p265 = scmp.ne.s32.totalorder %s256, %s257
      %p266 = scmp.eq.s32.totalorder %s26, 0
      %p267 = por %p265, %p266
      %p268 = scmp.ne.s32.totalorder %s256, %s257
      %p269 = scmp.eq.s32.totalorder %s27, 1
      %p270 = por %p268, %p269
      %p272 = scmp.ne.s32.totalorder %s257, %s271
      %p273 = scmp.eq.s32.totalorder %s27, 0
      %p274 = por %p272, %p273
      %s276 = sadd.s32 %s275, 1
      %p279 = scmp.eq.s32.totalorder %s21, 1
      %p280 = scmp.ne.s32.totalorder %s275, %s277
      %p281 = scmp.eq.s32.totalorder %s21, 0
      %p282 = por %p280, %p281
      %p283 = scmp.ne.s32.totalorder %s275, %s277
      %p284 = scmp.eq.s32.totalorder %s26, 1
      %p285 = por %p283, %p284
      %p286 = scmp.ne.s32.totalorder %s277, %s278
      %p287 = scmp.eq.s32.totalorder %s26, 0
      %p288 = por %p286, %p287
      %p289 = scmp.ne.s32.totalorder %s277, %s278
      %p290 = scmp.eq.s32.totalorder %s27, 1
      %p291 = por %p289, %p290
      %p293 = scmp.ne.s32.totalorder %s278, %s292
      %p294 = scmp.eq.s32.totalorder %s27, 0
      %p295 = por %p293, %p294
      %s297 = sadd.s32 %s296, 1
      %p300 = scmp.eq.s32.totalorder %s21, 1
      %p301 = scmp.ne.s32.totalorder %s296, %s298
      %p302 = scmp.eq.s32.totalorder %s21, 0
      %p303 = por %p301, %p302
      %p304 = scmp.ne.s32.totalorder %s296, %s298
      %p305 = scmp.eq.s32.totalorder %s26, 1
      %p306 = por %p304, %p305
      %p307 = scmp.ne.s32.totalorder %s298, %s299
      %p308 = scmp.eq.s32.totalorder %s26, 0
      %p309 = por %p307, %p308
      %p310 = scmp.ne.s32.totalorder %s298, %s299
      %p311 = scmp.eq.s32.totalorder %s27, 1
      %p312 = por %p310, %p311
      %p314 = scmp.ne.s32.totalorder %s299, %s313
      %p315 = scmp.eq.s32.totalorder %s27, 0
      %p316 = por %p314, %p315
      %s317 = ssub.s32 %s28, %s40
      %s318 = ssub.s32 %s29, %s36
      %s319 = sor.u32 %s317, %s318
      %p320 = scmp.eq.s32.totalorder %s319, 0
      %s322 = sadd.s32 %s321, 1
      %s323 = scalar_select %p320, %s321, %s322
      %p326 = pneg %p320
      %p327 = scmp.eq.s32.totalorder %s21, 1
      %p328 = por %p326, %p327
      %p329 = scmp.ne.s32.totalorder %s321, %s324
      %p330 = scmp.eq.s32.totalorder %s21, 0
      %p331 = por %p329, %p330
      %p332 = scmp.ne.s32.totalorder %s321, %s324
      %p333 = scmp.eq.s32.totalorder %s26, 1
      %p334 = por %p332, %p333
      %p335 = scmp.ne.s32.totalorder %s324, %s325
      %p336 = scmp.eq.s32.totalorder %s26, 0
      %p337 = por %p335, %p336
      %p338 = scmp.ne.s32.totalorder %s324, %s325
      %p339 = scmp.eq.s32.totalorder %s27, 1
      %p340 = por %p338, %p339
      %p342 = scmp.ne.s32.totalorder %s325, %s341
      %p343 = scmp.eq.s32.totalorder %s27, 0
      %p344 = por %p342, %p343
      %p345 = scmp.le.s32.totalorder 1, %s21
      %p346 = scmp.lt.s32.totalorder %s21, 3
      %p347 = pnand %p345, %p346
      %p348 = pneg %p347
      // Predicated region
      $region9: #{tpu_custom_call.1} parent=5 // pred_check
        _
      $region10: #{tpu_custom_call.1} parent=5 // pred_check_branch
        %350 = sbr.rel (%p347) target = $region12
      $region11: #{tpu_custom_call.1} parent=5 // pred_region
        %s351 = ssub.s32 %s21, 1
        // Predicated region
        $region13: #{tpu_custom_call.1} parent=11 // pred_check
          %p352 = pneg %p162
        $region14: #{tpu_custom_call.1} parent=11 // pred_check_branch
          %354 = sbr.rel (%p352) target = $region16
        $region15: #{tpu_custom_call.1} parent=11 // pred_region
          _
        $region16: #{tpu_custom_call.1} parent=11 // pred_fallthru
          _
        // Predicated region
        $region17: #{tpu_custom_call.1} parent=11 // pred_check
          %p355 = pneg %p183
        $region18: #{tpu_custom_call.1} parent=11 // pred_check_branch
          %357 = sbr.rel (%p355) target = $region20
        $region19: #{tpu_custom_call.1} parent=11 // pred_region
          _
        $region20: #{tpu_custom_call.1} parent=11 // pred_fallthru
          _
        // Predicated region
        $region21: #{tpu_custom_call.1} parent=11 // pred_check
          %p358 = pneg %p204
        $region22: #{tpu_custom_call.1} parent=11 // pred_check_branch
          %360 = sbr.rel (%p358) target = $region24
        $region23: #{tpu_custom_call.1} parent=11 // pred_region
          _
        $region24: #{tpu_custom_call.1} parent=11 // pred_fallthru
          _
        // Predicated region
        $region25: #{tpu_custom_call.1} parent=11 // pred_check
          %p361 = pneg %p225
        $region26: #{tpu_custom_call.1} parent=11 // pred_check_branch
          %363 = sbr.rel (%p361) target = $region28
        $region27: #{tpu_custom_call.1} parent=11 // pred_region
          _
        $region28: #{tpu_custom_call.1} parent=11 // pred_fallthru
          _
        // Predicated region
        $region29: #{tpu_custom_call.1} parent=11 // pred_check
          %p364 = pneg %p246
        $region30: #{tpu_custom_call.1} parent=11 // pred_check_branch
          %366 = sbr.rel (%p364) target = $region32
        $region31: #{tpu_custom_call.1} parent=11 // pred_region
          _
        $region32: #{tpu_custom_call.1} parent=11 // pred_fallthru
          _
        // Predicated region
        $region33: #{tpu_custom_call.1} parent=11 // pred_check
          %p367 = pneg %p267
        $region34: #{tpu_custom_call.1} parent=11 // pred_check_branch
          %369 = sbr.rel (%p367) target = $region36
        $region35: #{tpu_custom_call.1} parent=11 // pred_region
          _
        $region36: #{tpu_custom_call.1} parent=11 // pred_fallthru
          _
        // Predicated region
        $region37: #{tpu_custom_call.1} parent=11 // pred_check
          %p370 = pneg %p288
        $region38: #{tpu_custom_call.1} parent=11 // pred_check_branch
          %372 = sbr.rel (%p370) target = $region40
        $region39: #{tpu_custom_call.1} parent=11 // pred_region
          _
        $region40: #{tpu_custom_call.1} parent=11 // pred_fallthru
          _
        // Predicated region
        $region41: #{tpu_custom_call.1} parent=11 // pred_check
          %p373 = pneg %p309
        $region42: #{tpu_custom_call.1} parent=11 // pred_check_branch
          %375 = sbr.rel (%p373) target = $region44
        $region43: #{tpu_custom_call.1} parent=11 // pred_region
          _
        $region44: #{tpu_custom_call.1} parent=11 // pred_fallthru
          _
      $region12: #{tpu_custom_call.1} parent=5 // pred_fallthru
        _
      %p376 = scmp.lt.s32.totalorder %s21, 2
      // Predicated region
      $region45: #{tpu_custom_call.1} parent=5 // pred_check
        %p377 = pneg %p376
      $region46: #{tpu_custom_call.1} parent=5 // pred_check_branch
        %379 = sbr.rel (%p377) target = $region48
      $region47: #{tpu_custom_call.1} parent=5 // pred_region
        // Predicated region
        $region49: #{tpu_custom_call.1} parent=47 // pred_check
          %p380 = pneg %p55
        $region50: #{tpu_custom_call.1} parent=47 // pred_check_branch
          %382 = sbr.rel (%p380) target = $region52
        $region51: #{tpu_custom_call.1} parent=47 // pred_region
          %s383 = smul.u32 16, %s29
          %p384 = scmp.lt.s32.totalorder %s28, 1
          %s385 = scalar_select %p384, %s28, 1
          %p386 = scmp.lt.s32.totalorder %s383, 15
          %s387 = scalar_select %p386, %s383, 15
          %s388 = smul.addr %s385, 16
          %s389 = sadd.s32 %s387, %s388
          %s390 = smul.addr %s389, 4
          %s391 = scalar_lea.vmem %s0, %s390
          %s392 = smul.u32 16, %s29
        $region52: #{tpu_custom_call.1} parent=47 // pred_fallthru
          _
        // Predicated region
        $region53: #{tpu_custom_call.1} parent=47 // pred_check
          %p393 = pneg %p81
        $region54: #{tpu_custom_call.1} parent=47 // pred_check_branch
          %395 = sbr.rel (%p393) target = $region56
        $region55: #{tpu_custom_call.1} parent=47 // pred_region
          %p396 = scmp.lt.s32.totalorder %s28, 1
          %s397 = scalar_select %p396, %s28, 1
          %s398 = smul.addr %s397, 16
          %s399 = smul.addr %s398, 4
          %s400 = scalar_lea.vmem %s1, %s399
        $region56: #{tpu_custom_call.1} parent=47 // pred_fallthru
          _
        // Predicated region
        $region57: #{tpu_custom_call.1} parent=47 // pred_check
          %p401 = pneg %p107
        $region58: #{tpu_custom_call.1} parent=47 // pred_check_branch
          %403 = sbr.rel (%p401) target = $region60
        $region59: #{tpu_custom_call.1} parent=47 // pred_region
          %p404 = scmp.lt.s32.totalorder %s28, 1
          %s405 = scalar_select %p404, %s28, 1
          %s406 = scalar_lea.vmem %s2, %s405
        $region60: #{tpu_custom_call.1} parent=47 // pred_fallthru
          _
        // Predicated region
        $region61: #{tpu_custom_call.1} parent=47 // pred_check
          %p407 = pneg %p135
        $region62: #{tpu_custom_call.1} parent=47 // pred_check_branch
          %409 = sbr.rel (%p407) target = $region64
        $region63: #{tpu_custom_call.1} parent=47 // pred_region
          %s410 = smul.u32 16, %s29
          %p411 = scmp.lt.s32.totalorder %s28, 1
          %s412 = scalar_select %p411, %s28, 1
          %p413 = scmp.lt.s32.totalorder %s410, 15
          %s414 = scalar_select %p413, %s410, 15
          %s415 = smul.addr %s412, 16
          %s416 = sadd.s32 %s414, %s415
          %s417 = smul.addr %s416, 8
          %s418 = scalar_lea.vmem %s3, %s417
          %s419 = smul.u32 16, %s29
        $region64: #{tpu_custom_call.1} parent=47 // pred_fallthru
          _
      $region48: #{tpu_custom_call.1} parent=5 // pred_fallthru
        _
      %p420 = scmp.le.s32.totalorder 1, %s21
      %p421 = scmp.lt.s32.totalorder %s21, 3
      %p422 = pnand %p420, %p421
      %p423 = pneg %p422
      // Predicated region
      $region65: #{tpu_custom_call.1} parent=5 // pred_check
        _
      $region66: #{tpu_custom_call.1} parent=5 // pred_check_branch
        %425 = sbr.rel (%p422) target = $region68
      $region67: #{tpu_custom_call.1} parent=5 // pred_region
        %s426 = ssub.s32 %s21, 1
        %s427 = smul.u32 16, %s31
        %p428 = scmp.lt.s32.totalorder %s30, 1
        %s429 = scalar_select %p428, %s30, 1
        %p430 = scmp.lt.s32.totalorder %s427, 15
        %s431 = scalar_select %p430, %s427, 15
        %s432 = smul.addr %s429, 16
        %s433 = sadd.s32 %s431, %s432
        %s434 = smul.addr %s433, 4
        %s435 = scalar_lea.vmem %s0, %s434
        %p436 = pneg %p61
        %p437 = pneg %p58
        %p438 = scmp.lt.s32.totalorder %s30, 1
        %s439 = scalar_select %p438, %s30, 1
        %s440 = smul.addr %s439, 16
        %s441 = smul.addr %s440, 4
        %s442 = scalar_lea.vmem %s1, %s441
        %p443 = pneg %p87
        %p444 = pneg %p84
        %p445 = scmp.lt.s32.totalorder %s30, 1
        %s446 = scalar_select %p445, %s30, 1
        %s447 = scalar_lea.vmem %s2, %s446
        %p448 = pneg %p113
        %p449 = pneg %p110
        %s450 = smul.u32 16, %s31
        %p451 = scmp.lt.s32.totalorder %s30, 1
        %s452 = scalar_select %p451, %s30, 1
        %p453 = scmp.lt.s32.totalorder %s450, 15
        %s454 = scalar_select %p453, %s450, 15
        %s455 = smul.addr %s452, 16
        %s456 = sadd.s32 %s454, %s455
        %s457 = smul.addr %s456, 8
        %s458 = scalar_lea.vmem %s3, %s457
        %p459 = pneg %p141
        %p460 = pneg %p138
        %p461 = pneg %p162
        %p462 = pneg %p159
        %p463 = pneg %p183
        %p464 = pneg %p180
        %p465 = pneg %p204
        %p466 = pneg %p201
        %p467 = pneg %p225
        %p468 = pneg %p222
        %p469 = pneg %p246
        %p470 = pneg %p243
        %p471 = pneg %p267
        %p472 = pneg %p264
        %p473 = pneg %p288
        %p474 = pneg %p285
        %p475 = pneg %p309
        %p476 = pneg %p306
        %p477 = pneg %p337
        %p478 = pneg %p334
        %s479 = sand.u32 %s324, 1
        %s480 = scalar_lea.sflag [#allocation3], %s479
        %s481 = sand.u32 %s324, 1
        %s482 = smul.addr %s481, 512
        %s483 = scalar_lea.vmem [#allocation2], %s482
        %s484 = smul.u32 16, %s31
        %p485 = scmp.lt.s32.totalorder %s30, 1
        %s486 = scalar_select %p485, %s30, 1
        %p487 = scmp.lt.s32.totalorder %s484, 15
        %s488 = scalar_select %p487, %s484, 15
        %s489 = smul.addr %s486, 16
        %s490 = sadd.s32 %s488, %s489
        %s491 = smul.addr %s490, 4
        %s492 = scalar_lea.vmem %s0, %s491
        %s493 = smul.u32 16, %s31
        %p494 = scmp.lt.s32.totalorder %s30, 1
        %s495 = scalar_select %p494, %s30, 1
        %s496 = smul.addr %s495, 16
        %s497 = smul.addr %s496, 4
        %s498 = scalar_lea.vmem %s1, %s497
        %p499 = scmp.lt.s32.totalorder %s30, 1
        %s500 = scalar_select %p499, %s30, 1
        %s501 = scalar_lea.vmem %s2, %s500
        %s502 = smul.u32 16, %s31
        %p503 = scmp.lt.s32.totalorder %s30, 1
        %s504 = scalar_select %p503, %s30, 1
        %p505 = scmp.lt.s32.totalorder %s502, 15
        %s506 = scalar_select %p505, %s502, 15
        %s507 = smul.addr %s504, 16
        %s508 = sadd.s32 %s506, %s507
        %s509 = smul.addr %s508, 8
        %s510 = scalar_lea.vmem %s3, %s509
        %s511 = smul.u32 16, %s31
        %s512 = smul.u32 16, %s31
        %v514 = vld [vmem:[%s492] sm:$0xf]
        %v515 = vld [vmem:[%s492 + $0x4] sm:$0xf]
        %v516 = vld [vmem:[%s492 + $0x8] sm:$0xf]
        %v517 = vld [vmem:[%s492 + $0xc] sm:$0xf]
        %v518 = vld [vmem:[%s492 + $0x10] sm:$0xf]
        %v519 = vld [vmem:[%s492 + $0x14] sm:$0xf]
        %v520 = vld [vmem:[%s492 + $0x18] sm:$0xf]
        %v521 = vld [vmem:[%s492 + $0x1c] sm:$0xf]
        %v522 = vld [vmem:[%s492 + $0x20] sm:$0xf]
        %v523 = vld [vmem:[%s492 + $0x24] sm:$0xf]
        %v524 = vld [vmem:[%s492 + $0x28] sm:$0xf]
        %v525 = vld [vmem:[%s492 + $0x2c] sm:$0xf]
        %v526 = vld [vmem:[%s492 + $0x30] sm:$0xf]
        %v527 = vld [vmem:[%s492 + $0x34] sm:$0xf]
        %v528 = vld [vmem:[%s492 + $0x38] sm:$0xf]
        %v529 = vld [vmem:[%s492 + $0x3c] sm:$0xf]
        %v530 = vld [vmem:[%s498] sm:$0xf]
        %v531 = vld [vmem:[%s498 + $0x4] sm:$0xf]
        %v532 = vld [vmem:[%s498 + $0x8] sm:$0xf]
        %v533 = vld [vmem:[%s498 + $0xc] sm:$0xf]
        %v534 = vld [vmem:[%s498 + $0x10] sm:$0xf]
        %v535 = vld [vmem:[%s498 + $0x14] sm:$0xf]
        %v536 = vld [vmem:[%s498 + $0x18] sm:$0xf]
        %v537 = vld [vmem:[%s498 + $0x1c] sm:$0xf]
        %v538 = vld [vmem:[%s498 + $0x20] sm:$0xf]
        %v539 = vld [vmem:[%s498 + $0x24] sm:$0xf]
        %v540 = vld [vmem:[%s498 + $0x28] sm:$0xf]
        %v541 = vld [vmem:[%s498 + $0x2c] sm:$0xf]
        %v542 = vld [vmem:[%s498 + $0x30] sm:$0xf]
        %v543 = vld [vmem:[%s498 + $0x34] sm:$0xf]
        %v544 = vld [vmem:[%s498 + $0x38] sm:$0xf]
        %v545 = vld [vmem:[%s498 + $0x3c] sm:$0xf]
        %v546 = vld [vmem:[%s4] sm:$0xf]
        %v547 = vld [vmem:[%s4 + $0x4] sm:$0xf]
        %v548 = vld [vmem:[%s4 + $0x8] sm:$0xf]
        %v549 = vld [vmem:[%s4 + $0xc] sm:$0xf]
        %v550 = vld [vmem:[%s5] sm:$0x1]
        %v552 = vlaneseq
        %v553 = vshrl.u32 %v552, 7
        %v554 = vsub.s32 0, %v553
        %v555 = vrot.slane %v550, %v554
        %v573 = vunpack.c.l.b16 %v514
        %v574 = vunpack.c.l.b16 %v515
        %v575 = vunpack.c.l.b16 %v516
        %v576 = vunpack.c.l.b16 %v517
        %v577 = vunpack.c.l.b16 %v518
        %v578 = vunpack.c.l.b16 %v519
        %v579 = vunpack.c.l.b16 %v520
        %v580 = vunpack.c.l.b16 %v521
        %v581 = vunpack.c.l.b16 %v522
        %v582 = vunpack.c.l.b16 %v523
        %v583 = vunpack.c.l.b16 %v524
        %v584 = vunpack.c.l.b16 %v525
        %v585 = vunpack.c.l.b16 %v526
        %v586 = vunpack.c.l.b16 %v527
        %v587 = vunpack.c.l.b16 %v528
        %v588 = vunpack.c.l.b16 %v529
        %v589 = vpack.c.b16 %v574, %v573
        %v590 = vpack.c.b16 %v576, %v575
        %v591 = vpack.c.b16 %v578, %v577
        %v592 = vpack.c.b16 %v580, %v579
        %v593 = vpack.c.b16 %v582, %v581
        %v594 = vpack.c.b16 %v584, %v583
        %v595 = vpack.c.b16 %v586, %v585
        %v596 = vpack.c.b16 %v588, %v587
        %v601 = vunpack.c.l.b16 %v546
        %v602 = vunpack.c.l.b16 %v547
        %v603 = vunpack.c.l.b16 %v548
        %v604 = vunpack.c.l.b16 %v549
        %v605 = vpack.c.b16 %v602, %v601
        %v606 = vpack.c.b16 %v604, %v603
        %vm609 = vcmask 261120
        %v611 = vsel %vm609, %v589, 0
        %v614 = vsel %vm609, %v590, 0
        %v617 = vsel %vm609, %v591, 0
        %v620 = vsel %vm609, %v592, 0
        %v623 = vsel %vm609, %v593, 0
        %v626 = vsel %vm609, %v594, 0
        %v629 = vsel %vm609, %v595, 0
        %v632 = vsel %vm609, %v596, 0
        %634 = vmatprep.subr.bf16.mxu0 0
        %635 = vmatpush1.bf16.msra.mxu0 %v605
        %636 = vmatprep.subr.bf16.mxu0 0
        %637 = vmatpush1.bf16.msra.mxu0 %v606
        %638 = vmatprep.subr.bf16.mxu0 0
        %639 = vmatpush1.bf16.msra.mxu0 0
        %640 = vmatprep.subr.bf16.mxu0 0
        %641 = vmatpush1.bf16.msra.mxu0 0
        %642 = vmatprep.subr.bf16.mxu0 0
        %643 = vmatpush1.bf16.msra.mxu0 0
        %644 = vmatprep.subr.bf16.mxu0 0
        %645 = vmatpush1.bf16.msra.mxu0 0
        %646 = vmatprep.subr.bf16.mxu0 0
        %647 = vmatpush1.bf16.msra.mxu0 0
        %648 = vmatprep.subr.bf16.mxu0 0
        %649 = vmatpush1.bf16.msra.mxu0 0
        %650 = vmatprep.subr.bf16.mxu0 0
        %651 = vmatpush1.bf16.msra.mxu0 0
        %652 = vmatprep.subr.bf16.mxu0 0
        %653 = vmatpush1.bf16.msra.mxu0 0
        %654 = vmatprep.subr.bf16.mxu0 0
        %655 = vmatpush1.bf16.msra.mxu0 0
        %656 = vmatprep.subr.bf16.mxu0 0
        %657 = vmatpush1.bf16.msra.mxu0 0
        %658 = vmatprep.subr.bf16.mxu0 0
        %659 = vmatpush1.bf16.msra.mxu0 0
        %660 = vmatprep.subr.bf16.mxu0 0
        %661 = vmatpush1.bf16.msra.mxu0 0
        %662 = vmatprep.subr.bf16.mxu0 0
        %663 = vmatpush1.bf16.msra.mxu0 0
        %664 = vmatprep.subr.bf16.mxu0 0
        %665 = vmatpush1.bf16.msra.mxu0 0
        %666 = vmatprep.mubr.bf16.mxu0 0
        %667 = vmatmul.mubr.bf16.gmra.mrb[0].mxu0 %v611
        %v668 = vpop.f32.mrb[0].mxu0
        %v669 = vadd.f32 %v555, %v668
        %v670 = vpop.f32.mrb[0].mxu0
        %v671 = vpop.f32.mrb[0].mxu0
        %v672 = vadd.f32 %v555, %v671
        %v673 = vpop.f32.mrb[0].mxu0
        %674 = vmatprep.mubr.bf16.mxu0 0
        %675 = vmatmul.mubr.bf16.gmra.mrb[0].mxu0 %v614
        %v676 = vpop.f32.mrb[0].mxu0
        %v677 = vadd.f32 %v555, %v676
        %v678 = vpop.f32.mrb[0].mxu0
        %v679 = vpop.f32.mrb[0].mxu0
        %v680 = vadd.f32 %v555, %v679
        %v681 = vpop.f32.mrb[0].mxu0
        %682 = vmatprep.mubr.bf16.mxu0 0
        %683 = vmatmul.mubr.bf16.gmra.mrb[0].mxu0 %v617
        %v684 = vpop.f32.mrb[0].mxu0
        %v685 = vadd.f32 %v555, %v684
        %v686 = vpop.f32.mrb[0].mxu0
        %v687 = vpop.f32.mrb[0].mxu0
        %v688 = vadd.f32 %v555, %v687
        %v689 = vpop.f32.mrb[0].mxu0
        %690 = vmatprep.mubr.bf16.mxu0 0
        %691 = vmatmul.mubr.bf16.gmra.mrb[0].mxu0 %v620
        %v692 = vpop.f32.mrb[0].mxu0
        %v693 = vadd.f32 %v555, %v692
        %v694 = vpop.f32.mrb[0].mxu0
        %v695 = vpop.f32.mrb[0].mxu0
        %v696 = vadd.f32 %v555, %v695
        %v697 = vpop.f32.mrb[0].mxu0
        %698 = vmatprep.mubr.bf16.mxu0 0
        %699 = vmatmul.mubr.bf16.gmra.mrb[0].mxu0 %v623
        %v700 = vpop.f32.mrb[0].mxu0
        %v701 = vadd.f32 %v555, %v700
        %v702 = vpop.f32.mrb[0].mxu0
        %v703 = vpop.f32.mrb[0].mxu0
        %v704 = vadd.f32 %v555, %v703
        %v705 = vpop.f32.mrb[0].mxu0
        %706 = vmatprep.mubr.bf16.mxu0 0
        %707 = vmatmul.mubr.bf16.gmra.mrb[0].mxu0 %v626
        %v708 = vpop.f32.mrb[0].mxu0
        %v709 = vadd.f32 %v555, %v708
        %v710 = vpop.f32.mrb[0].mxu0
        %v711 = vpop.f32.mrb[0].mxu0
        %v712 = vadd.f32 %v555, %v711
        %v713 = vpop.f32.mrb[0].mxu0
        %714 = vmatprep.mubr.bf16.mxu0 0
        %715 = vmatmul.mubr.bf16.gmra.mrb[0].mxu0 %v629
        %v716 = vpop.f32.mrb[0].mxu0
        %v717 = vadd.f32 %v555, %v716
        %v718 = vpop.f32.mrb[0].mxu0
        %v719 = vpop.f32.mrb[0].mxu0
        %v720 = vadd.f32 %v555, %v719
        %v721 = vpop.f32.mrb[0].mxu0
        %722 = vmatprep.mubr.bf16.mxu0 0
        %723 = vmatmul.mubr.bf16.gmra.mrb[0].mxu0 %v632
        %v724 = vpop.f32.mrb[0].mxu0
        %v725 = vadd.f32 %v555, %v724
        %v726 = vpop.f32.mrb[0].mxu0
        %v727 = vpop.f32.mrb[0].mxu0
        %v728 = vadd.f32 %v555, %v727
        %v729 = vpop.f32.mrb[0].mxu0
        %730 = vdwg.mxu0
        %v731 = vmul.f32 %v669, 0.5
        %v732 = vmul.f32 %v672, 0.5
        %v733 = vmul.f32 %v677, 0.5
        %v734 = vmul.f32 %v680, 0.5
        %v735 = vmul.f32 %v685, 0.5
        %v736 = vmul.f32 %v688, 0.5
        %v737 = vmul.f32 %v693, 0.5
        %v738 = vmul.f32 %v696, 0.5
        %v739 = vmul.f32 %v701, 0.5
        %v740 = vmul.f32 %v704, 0.5
        %v741 = vmul.f32 %v709, 0.5
        %v742 = vmul.f32 %v712, 0.5
        %v743 = vmul.f32 %v717, 0.5
        %v744 = vmul.f32 %v720, 0.5
        %v745 = vmul.f32 %v725, 0.5
        %v746 = vmul.f32 %v728, 0.5
        %v747 = vrcp.pop 1.4142135
        %v748 = vmul.f32 %v669, %v747
        %v749 = vmul.f32 %v672, %v747
        %v750 = vmul.f32 %v677, %v747
        %v751 = vmul.f32 %v680, %v747
        %v752 = vmul.f32 %v685, %v747
        %v753 = vmul.f32 %v688, %v747
        %v754 = vmul.f32 %v693, %v747
        %v755 = vmul.f32 %v696, %v747
        %v756 = vmul.f32 %v701, %v747
        %v757 = vmul.f32 %v704, %v747
        %v758 = vmul.f32 %v709, %v747
        %v759 = vmul.f32 %v712, %v747
        %v760 = vmul.f32 %v717, %v747
        %v761 = vmul.f32 %v720, %v747
        %v762 = vmul.f32 %v725, %v747
        %v763 = vmul.f32 %v728, %v747
        %v764 = verf.f32.pop %v748
        %v765 = verf.f32.pop %v749
        %v766 = verf.f32.pop %v750
        %v767 = verf.f32.pop %v751
        %v768 = verf.f32.pop %v752
        %v769 = verf.f32.pop %v753
        %v770 = verf.f32.pop %v754
        %v771 = verf.f32.pop %v755
        %v772 = verf.f32.pop %v756
        %v773 = verf.f32.pop %v757
        %v774 = verf.f32.pop %v758
        %v775 = verf.f32.pop %v759
        %v776 = verf.f32.pop %v760
        %v777 = verf.f32.pop %v761
        %v778 = verf.f32.pop %v762
        %v779 = verf.f32.pop %v763
        %v780 = vadd.f32 %v764, 1.0
        %v781 = vadd.f32 %v765, 1.0
        %v782 = vadd.f32 %v766, 1.0
        %v783 = vadd.f32 %v767, 1.0
        %v784 = vadd.f32 %v768, 1.0
        %v785 = vadd.f32 %v769, 1.0
        %v786 = vadd.f32 %v770, 1.0
        %v787 = vadd.f32 %v771, 1.0
        %v788 = vadd.f32 %v772, 1.0
        %v789 = vadd.f32 %v773, 1.0
        %v790 = vadd.f32 %v774, 1.0
        %v791 = vadd.f32 %v775, 1.0
        %v792 = vadd.f32 %v776, 1.0
        %v793 = vadd.f32 %v777, 1.0
        %v794 = vadd.f32 %v778, 1.0
        %v795 = vadd.f32 %v779, 1.0
        %v796 = vmul.f32 %v731, %v780
        %v797 = vmul.f32 %v732, %v781
        %v798 = vmul.f32 %v733, %v782
        %v799 = vmul.f32 %v734, %v783
        %v800 = vmul.f32 %v735, %v784
        %v801 = vmul.f32 %v736, %v785
        %v802 = vmul.f32 %v737, %v786
        %v803 = vmul.f32 %v738, %v787
        %v804 = vmul.f32 %v739, %v788
        %v805 = vmul.f32 %v740, %v789
        %v806 = vmul.f32 %v741, %v790
        %v807 = vmul.f32 %v742, %v791
        %v808 = vmul.f32 %v743, %v792
        %v809 = vmul.f32 %v744, %v793
        %v810 = vmul.f32 %v745, %v794
        %v811 = vmul.f32 %v746, %v795
        %v812 = vld [vmem:[%s6] sm:$0xf]
        %v813 = vld [vmem:[%s6 + $0x4] sm:$0xf]
        %v814 = vld [vmem:[%s6 + $0x8] sm:$0xf]
        %v815 = vld [vmem:[%s6 + $0xc] sm:$0xf]
        %v816 = vld [vmem:[%s7] sm:$0x1]
        %v818 = vlaneseq
        %v819 = vshrl.u32 %v818, 7
        %v820 = vsub.s32 0, %v819
        %v821 = vrot.slane %v816, %v820
        %v839 = vunpack.c.l.b16 %v530
        %v840 = vunpack.c.l.b16 %v531
        %v841 = vunpack.c.l.b16 %v532
        %v842 = vunpack.c.l.b16 %v533
        %v843 = vunpack.c.l.b16 %v534
        %v844 = vunpack.c.l.b16 %v535
        %v845 = vunpack.c.l.b16 %v536
        %v846 = vunpack.c.l.b16 %v537
        %v847 = vunpack.c.l.b16 %v538
        %v848 = vunpack.c.l.b16 %v539
        %v849 = vunpack.c.l.b16 %v540
        %v850 = vunpack.c.l.b16 %v541
        %v851 = vunpack.c.l.b16 %v542
        %v852 = vunpack.c.l.b16 %v543
        %v853 = vunpack.c.l.b16 %v544
        %v854 = vunpack.c.l.b16 %v545
        %v855 = vpack.c.b16 %v840, %v839
        %v856 = vpack.c.b16 %v842, %v841
        %v857 = vpack.c.b16 %v844, %v843
        %v858 = vpack.c.b16 %v846, %v845
        %v859 = vpack.c.b16 %v848, %v847
        %v860 = vpack.c.b16 %v850, %v849
        %v861 = vpack.c.b16 %v852, %v851
        %v862 = vpack.c.b16 %v854, %v853
        %v867 = vunpack.c.l.b16 %v812
        %v868 = vunpack.c.l.b16 %v813
        %v869 = vunpack.c.l.b16 %v814
        %v870 = vunpack.c.l.b16 %v815
        %v871 = vpack.c.b16 %v868, %v867
        %v872 = vpack.c.b16 %v870, %v869
        %v876 = vsel %vm609, %v855, 0
        %v879 = vsel %vm609, %v856, 0
        %v882 = vsel %vm609, %v857, 0
        %v885 = vsel %vm609, %v858, 0
        %v888 = vsel %vm609, %v859, 0
        %v891 = vsel %vm609, %v860, 0
        %v894 = vsel %vm609, %v861, 0
        %v897 = vsel %vm609, %v862, 0
        %899 = vmatprep.subr.bf16.mxu0 0
        %900 = vmatpush1.bf16.msra.mxu0 %v871
        %901 = vmatprep.subr.bf16.mxu0 0
        %902 = vmatpush1.bf16.msra.mxu0 %v872
        %903 = vmatprep.subr.bf16.mxu0 0
        %904 = vmatpush1.bf16.msra.mxu0 0
        %905 = vmatprep.subr.bf16.mxu0 0
        %906 = vmatpush1.bf16.msra.mxu0 0
        %907 = vmatprep.subr.bf16.mxu0 0
        %908 = vmatpush1.bf16.msra.mxu0 0
        %909 = vmatprep.subr.bf16.mxu0 0
        %910 = vmatpush1.bf16.msra.mxu0 0
        %911 = vmatprep.subr.bf16.mxu0 0
        %912 = vmatpush1.bf16.msra.mxu0 0
        %913 = vmatprep.subr.bf16.mxu0 0
        %914 = vmatpush1.bf16.msra.mxu0 0
        %915 = vmatprep.subr.bf16.mxu0 0
        %916 = vmatpush1.bf16.msra.mxu0 0
        %917 = vmatprep.subr.bf16.mxu0 0
        %918 = vmatpush1.bf16.msra.mxu0 0
        %919 = vmatprep.subr.bf16.mxu0 0
        %920 = vmatpush1.bf16.msra.mxu0 0
        %921 = vmatprep.subr.bf16.mxu0 0
        %922 = vmatpush1.bf16.msra.mxu0 0
        %923 = vmatprep.subr.bf16.mxu0 0
        %924 = vmatpush1.bf16.msra.mxu0 0
        %925 = vmatprep.subr.bf16.mxu0 0
        %926 = vmatpush1.bf16.msra.mxu0 0
        %927 = vmatprep.subr.bf16.mxu0 0
        %928 = vmatpush1.bf16.msra.mxu0 0
        %929 = vmatprep.subr.bf16.mxu0 0
        %930 = vmatpush1.bf16.msra.mxu0 0
        %931 = vmatprep.mubr.bf16.mxu0 0
        %932 = vmatmul.mubr.bf16.gmra.mrb[0].mxu0 %v876
        %v933 = vpop.f32.mrb[0].mxu0
        %v934 = vadd.f32 %v821, %v933
        %v935 = vpop.f32.mrb[0].mxu0
        %v936 = vpop.f32.mrb[0].mxu0
        %v937 = vadd.f32 %v821, %v936
        %v938 = vpop.f32.mrb[0].mxu0
        %939 = vmatprep.mubr.bf16.mxu0 0
        %940 = vmatmul.mubr.bf16.gmra.mrb[0].mxu0 %v879
        %v941 = vpop.f32.mrb[0].mxu0
        %v942 = vadd.f32 %v821, %v941
        %v943 = vpop.f32.mrb[0].mxu0
        %v944 = vpop.f32.mrb[0].mxu0
        %v945 = vadd.f32 %v821, %v944
        %v946 = vpop.f32.mrb[0].mxu0
        %947 = vmatprep.mubr.bf16.mxu0 0
        %948 = vmatmul.mubr.bf16.gmra.mrb[0].mxu0 %v882
        %v949 = vpop.f32.mrb[0].mxu0
        %v950 = vadd.f32 %v821, %v949
        %v951 = vpop.f32.mrb[0].mxu0
        %v952 = vpop.f32.mrb[0].mxu0
        %v953 = vadd.f32 %v821, %v952
        %v954 = vpop.f32.mrb[0].mxu0
        %955 = vmatprep.mubr.bf16.mxu0 0
        %956 = vmatmul.mubr.bf16.gmra.mrb[0].mxu0 %v885
        %v957 = vpop.f32.mrb[0].mxu0
        %v958 = vadd.f32 %v821, %v957
        %v959 = vpop.f32.mrb[0].mxu0
        %v960 = vpop.f32.mrb[0].mxu0
        %v961 = vadd.f32 %v821, %v960
        %v962 = vpop.f32.mrb[0].mxu0
        %963 = vmatprep.mubr.bf16.mxu0 0
        %964 = vmatmul.mubr.bf16.gmra.mrb[0].mxu0 %v888
        %v965 = vpop.f32.mrb[0].mxu0
        %v966 = vadd.f32 %v821, %v965
        %v967 = vpop.f32.mrb[0].mxu0
        %v968 = vpop.f32.mrb[0].mxu0
        %v969 = vadd.f32 %v821, %v968
        %v970 = vpop.f32.mrb[0].mxu0
        %971 = vmatprep.mubr.bf16.mxu0 0
        %972 = vmatmul.mubr.bf16.gmra.mrb[0].mxu0 %v891
        %v973 = vpop.f32.mrb[0].mxu0
        %v974 = vadd.f32 %v821, %v973
        %v975 = vpop.f32.mrb[0].mxu0
        %v976 = vpop.f32.mrb[0].mxu0
        %v977 = vadd.f32 %v821, %v976
        %v978 = vpop.f32.mrb[0].mxu0
        %979 = vmatprep.mubr.bf16.mxu0 0
        %980 = vmatmul.mubr.bf16.gmra.mrb[0].mxu0 %v894
        %v981 = vpop.f32.mrb[0].mxu0
        %v982 = vadd.f32 %v821, %v981
        %v983 = vpop.f32.mrb[0].mxu0
        %v984 = vpop.f32.mrb[0].mxu0
        %v985 = vadd.f32 %v821, %v984
        %v986 = vpop.f32.mrb[0].mxu0
        %987 = vmatprep.mubr.bf16.mxu0 0
        %988 = vmatmul.mubr.bf16.gmra.mrb[0].mxu0 %v897
        %v989 = vpop.f32.mrb[0].mxu0
        %v990 = vadd.f32 %v821, %v989
        %v991 = vpop.f32.mrb[0].mxu0
        %v992 = vpop.f32.mrb[0].mxu0
        %v993 = vadd.f32 %v821, %v992
        %v994 = vpop.f32.mrb[0].mxu0
        %995 = vdwg.mxu0
        %v996 = vmul.f32 %v934, 0.5
        %v997 = vmul.f32 %v937, 0.5
        %v998 = vmul.f32 %v942, 0.5
        %v999 = vmul.f32 %v945, 0.5
        %v1000 = vmul.f32 %v950, 0.5
        %v1001 = vmul.f32 %v953, 0.5
        %v1002 = vmul.f32 %v958, 0.5
        %v1003 = vmul.f32 %v961, 0.5
        %v1004 = vmul.f32 %v966, 0.5
        %v1005 = vmul.f32 %v969, 0.5
        %v1006 = vmul.f32 %v974, 0.5
        %v1007 = vmul.f32 %v977, 0.5
        %v1008 = vmul.f32 %v982, 0.5
        %v1009 = vmul.f32 %v985, 0.5
        %v1010 = vmul.f32 %v990, 0.5
        %v1011 = vmul.f32 %v993, 0.5
        %v1012 = vmul.f32 %v934, %v747
        %v1013 = vmul.f32 %v937, %v747
        %v1014 = vmul.f32 %v942, %v747
        %v1015 = vmul.f32 %v945, %v747
        %v1016 = vmul.f32 %v950, %v747
        %v1017 = vmul.f32 %v953, %v747
        %v1018 = vmul.f32 %v958, %v747
        %v1019 = vmul.f32 %v961, %v747
        %v1020 = vmul.f32 %v966, %v747
        %v1021 = vmul.f32 %v969, %v747
        %v1022 = vmul.f32 %v974, %v747
        %v1023 = vmul.f32 %v977, %v747
        %v1024 = vmul.f32 %v982, %v747
        %v1025 = vmul.f32 %v985, %v747
        %v1026 = vmul.f32 %v990, %v747
        %v1027 = vmul.f32 %v993, %v747
        %v1028 = verf.f32.pop %v1012
        %v1029 = verf.f32.pop %v1013
        %v1030 = verf.f32.pop %v1014
        %v1031 = verf.f32.pop %v1015
        %v1032 = verf.f32.pop %v1016
        %v1033 = verf.f32.pop %v1017
        %v1034 = verf.f32.pop %v1018
        %v1035 = verf.f32.pop %v1019
        %v1036 = verf.f32.pop %v1020
        %v1037 = verf.f32.pop %v1021
        %v1038 = verf.f32.pop %v1022
        %v1039 = verf.f32.pop %v1023
        %v1040 = verf.f32.pop %v1024
        %v1041 = verf.f32.pop %v1025
        %v1042 = verf.f32.pop %v1026
        %v1043 = verf.f32.pop %v1027
        %v1044 = vadd.f32 %v1028, 1.0
        %v1045 = vadd.f32 %v1029, 1.0
        %v1046 = vadd.f32 %v1030, 1.0
        %v1047 = vadd.f32 %v1031, 1.0
        %v1048 = vadd.f32 %v1032, 1.0
        %v1049 = vadd.f32 %v1033, 1.0
        %v1050 = vadd.f32 %v1034, 1.0
        %v1051 = vadd.f32 %v1035, 1.0
        %v1052 = vadd.f32 %v1036, 1.0
        %v1053 = vadd.f32 %v1037, 1.0
        %v1054 = vadd.f32 %v1038, 1.0
        %v1055 = vadd.f32 %v1039, 1.0
        %v1056 = vadd.f32 %v1040, 1.0
        %v1057 = vadd.f32 %v1041, 1.0
        %v1058 = vadd.f32 %v1042, 1.0
        %v1059 = vadd.f32 %v1043, 1.0
        %v1060 = vmul.f32 %v996, %v1044
        %v1061 = vmul.f32 %v997, %v1045
        %v1062 = vmul.f32 %v998, %v1046
        %v1063 = vmul.f32 %v999, %v1047
        %v1064 = vmul.f32 %v1000, %v1048
        %v1065 = vmul.f32 %v1001, %v1049
        %v1066 = vmul.f32 %v1002, %v1050
        %v1067 = vmul.f32 %v1003, %v1051
        %v1068 = vmul.f32 %v1004, %v1052
        %v1069 = vmul.f32 %v1005, %v1053
        %v1070 = vmul.f32 %v1006, %v1054
        %v1071 = vmul.f32 %v1007, %v1055
        %v1072 = vmul.f32 %v1008, %v1056
        %v1073 = vmul.f32 %v1009, %v1057
        %v1074 = vmul.f32 %v1010, %v1058
        %v1075 = vmul.f32 %v1011, %v1059
        %v1076 = vpack.c.bf16 %v797, %v796
        %v1077 = vpack.c.bf16 %v799, %v798
        %v1078 = vpack.c.bf16 %v801, %v800
        %v1079 = vpack.c.bf16 %v803, %v802
        %v1080 = vpack.c.bf16 %v805, %v804
        %v1081 = vpack.c.bf16 %v807, %v806
        %v1082 = vpack.c.bf16 %v809, %v808
        %v1083 = vpack.c.bf16 %v811, %v810
        %v1084 = vpack.c.bf16 %v1061, %v1060
        %v1085 = vpack.c.bf16 %v1063, %v1062
        %v1086 = vpack.c.bf16 %v1065, %v1064
        %v1087 = vpack.c.bf16 %v1067, %v1066
        %v1088 = vpack.c.bf16 %v1069, %v1068
        %v1089 = vpack.c.bf16 %v1071, %v1070
        %v1090 = vpack.c.bf16 %v1073, %v1072
        %v1091 = vpack.c.bf16 %v1075, %v1074
        %v1092 = vld [vmem:[%s9] sm:$0xf]
        %v1093 = vld [vmem:[%s9 + $0x4] sm:$0xf]
        %v1094 = vld [vmem:[%s9 + $0x8] sm:$0xf]
        %v1095 = vld [vmem:[%s9 + $0xc] sm:$0xf]
        %v1096 = vld [vmem:[%s9 + $0x10] sm:$0xf]
        %v1097 = vld [vmem:[%s9 + $0x14] sm:$0xf]
        %v1098 = vld [vmem:[%s9 + $0x18] sm:$0xf]
        %v1099 = vld [vmem:[%s9 + $0x1c] sm:$0xf]
        %v1100 = vld [vmem:[%s9 + $0x20] sm:$0xf]
        %v1101 = vld [vmem:[%s9 + $0x24] sm:$0xf]
        %v1102 = vld [vmem:[%s9 + $0x28] sm:$0xf]
        %v1103 = vld [vmem:[%s9 + $0x2c] sm:$0xf]
        %v1104 = vld [vmem:[%s9 + $0x30] sm:$0xf]
        %v1105 = vld [vmem:[%s9 + $0x34] sm:$0xf]
        %v1106 = vld [vmem:[%s9 + $0x38] sm:$0xf]
        %v1107 = vld [vmem:[%s9 + $0x3c] sm:$0xf]
        %v1124 = vunpack.c.l.b16 %v1092
        %v1125 = vunpack.c.l.b16 %v1093
        %v1126 = vunpack.c.l.b16 %v1094
        %v1127 = vunpack.c.l.b16 %v1095
        %v1128 = vunpack.c.l.b16 %v1096
        %v1129 = vunpack.c.l.b16 %v1097
        %v1130 = vunpack.c.l.b16 %v1098
        %v1131 = vunpack.c.l.b16 %v1099
        %v1132 = vunpack.c.l.b16 %v1100
        %v1133 = vunpack.c.l.b16 %v1101
        %v1134 = vunpack.c.l.b16 %v1102
        %v1135 = vunpack.c.l.b16 %v1103
        %v1136 = vunpack.c.l.b16 %v1104
        %v1137 = vunpack.c.l.b16 %v1105
        %v1138 = vunpack.c.l.b16 %v1106
        %v1139 = vunpack.c.l.b16 %v1107
        %v1140 = vpack.c.b16 %v1125, %v1124
        %v1141 = vpack.c.b16 %v1127, %v1126
        %v1142 = vpack.c.b16 %v1129, %v1128
        %v1143 = vpack.c.b16 %v1131, %v1130
        %v1144 = vpack.c.b16 %v1133, %v1132
        %v1145 = vpack.c.b16 %v1135, %v1134
        %v1146 = vpack.c.b16 %v1137, %v1136
        %v1147 = vpack.c.b16 %v1139, %v1138
        %1156 = vmatprep.subr.bf16.mxu0 0
        %1157 = vmatpush1.bf16.msra.mxu0 %v1140
        %1158 = vmatprep.subr.bf16.mxu0 0
        %1159 = vmatpush1.bf16.msra.mxu0 %v1141
        %1160 = vmatprep.subr.bf16.mxu0 0
        %1161 = vmatpush1.bf16.msra.mxu0 %v1142
        %1162 = vmatprep.subr.bf16.mxu0 0
        %1163 = vmatpush1.bf16.msra.mxu0 %v1143
        %1164 = vmatprep.subr.bf16.mxu0 0
        %1165 = vmatpush1.bf16.msra.mxu0 %v1144
        %1166 = vmatprep.subr.bf16.mxu0 0
        %1167 = vmatpush1.bf16.msra.mxu0 %v1145
        %1168 = vmatprep.subr.bf16.mxu0 0
        %1169 = vmatpush1.bf16.msra.mxu0 %v1146
        %1170 = vmatprep.subr.bf16.mxu0 0
        %1171 = vmatpush1.bf16.msra.mxu0 %v1147
        %1172 = vmatprep.subr.bf16.mxu0 0
        %1173 = vmatpush1.bf16.msra.mxu0 0
        %1174 = vmatprep.subr.bf16.mxu0 0
        %1175 = vmatpush1.bf16.msra.mxu0 0
        %1176 = vmatprep.subr.bf16.mxu0 0
        %1177 = vmatpush1.bf16.msra.mxu0 0
        %1178 = vmatprep.subr.bf16.mxu0 0
        %1179 = vmatpush1.bf16.msra.mxu0 0
        %1180 = vmatprep.subr.bf16.mxu0 0
        %1181 = vmatpush1.bf16.msra.mxu0 0
        %1182 = vmatprep.subr.bf16.mxu0 0
        %1183 = vmatpush1.bf16.msra.mxu0 0
        %1184 = vmatprep.subr.bf16.mxu0 0
        %1185 = vmatpush1.bf16.msra.mxu0 0
        %1186 = vmatprep.subr.bf16.mxu0 0
        %1187 = vmatpush1.bf16.msra.mxu0 0
        %1188 = vmatprep.mubr.bf16.mxu0 0
        %1189 = vmatmul.mubr.bf16.gmra.mrb[0].mxu0 %v1076
        %v1190 = vpop.f32.mrb[0].mxu0
        %v1191 = vadd.f32 0.0, %v1190
        %v1192 = vpop.f32.mrb[0].mxu0
        %v1193 = vpop.f32.mrb[0].mxu0
        %v1194 = vadd.f32 0.0, %v1193
        %v1195 = vpop.f32.mrb[0].mxu0
        %1196 = vmatprep.mubr.bf16.mxu0 0
        %1197 = vmatmul.mubr.bf16.gmra.mrb[0].mxu0 %v1077
        %v1198 = vpop.f32.mrb[0].mxu0
        %v1199 = vadd.f32 0.0, %v1198
        %v1200 = vpop.f32.mrb[0].mxu0
        %v1201 = vpop.f32.mrb[0].mxu0
        %v1202 = vadd.f32 0.0, %v1201
        %v1203 = vpop.f32.mrb[0].mxu0
        %1204 = vmatprep.mubr.bf16.mxu0 0
        %1205 = vmatmul.mubr.bf16.gmra.mrb[0].mxu0 %v1078
        %v1206 = vpop.f32.mrb[0].mxu0
        %v1207 = vadd.f32 0.0, %v1206
        %v1208 = vpop.f32.mrb[0].mxu0
        %v1209 = vpop.f32.mrb[0].mxu0
        %v1210 = vadd.f32 0.0, %v1209
        %v1211 = vpop.f32.mrb[0].mxu0
        %1212 = vmatprep.mubr.bf16.mxu0 0
        %1213 = vmatmul.mubr.bf16.gmra.mrb[0].mxu0 %v1079
        %v1214 = vpop.f32.mrb[0].mxu0
        %v1215 = vadd.f32 0.0, %v1214
        %v1216 = vpop.f32.mrb[0].mxu0
        %v1217 = vpop.f32.mrb[0].mxu0
        %v1218 = vadd.f32 0.0, %v1217
        %v1219 = vpop.f32.mrb[0].mxu0
        %1220 = vmatprep.mubr.bf16.mxu0 0
        %1221 = vmatmul.mubr.bf16.gmra.mrb[0].mxu0 %v1080
        %v1222 = vpop.f32.mrb[0].mxu0
        %v1223 = vadd.f32 0.0, %v1222
        %v1224 = vpop.f32.mrb[0].mxu0
        %v1225 = vpop.f32.mrb[0].mxu0
        %v1226 = vadd.f32 0.0, %v1225
        %v1227 = vpop.f32.mrb[0].mxu0
        %1228 = vmatprep.mubr.bf16.mxu0 0
        %1229 = vmatmul.mubr.bf16.gmra.mrb[0].mxu0 %v1081
        %v1230 = vpop.f32.mrb[0].mxu0
        %v1231 = vadd.f32 0.0, %v1230
        %v1232 = vpop.f32.mrb[0].mxu0
        %v1233 = vpop.f32.mrb[0].mxu0
        %v1234 = vadd.f32 0.0, %v1233
        %v1235 = vpop.f32.mrb[0].mxu0
        %1236 = vmatprep.mubr.bf16.mxu0 0
        %1237 = vmatmul.mubr.bf16.gmra.mrb[0].mxu0 %v1082
        %v1238 = vpop.f32.mrb[0].mxu0
        %v1239 = vadd.f32 0.0, %v1238
        %v1240 = vpop.f32.mrb[0].mxu0
        %v1241 = vpop.f32.mrb[0].mxu0
        %v1242 = vadd.f32 0.0, %v1241
        %v1243 = vpop.f32.mrb[0].mxu0
        %1244 = vmatprep.mubr.bf16.mxu0 0
        %1245 = vmatmul.mubr.bf16.gmra.mrb[0].mxu0 %v1083
        %v1246 = vpop.f32.mrb[0].mxu0
        %v1247 = vadd.f32 0.0, %v1246
        %v1248 = vpop.f32.mrb[0].mxu0
        %v1249 = vpop.f32.mrb[0].mxu0
        %v1250 = vadd.f32 0.0, %v1249
        %v1251 = vpop.f32.mrb[0].mxu0
        %1252 = vdwg.mxu0
        %v1253 = vld [vmem:[%s10] sm:$0x3]
        %v1254 = vld [vmem:[%s11] sm:$0xf]
        %1256 = vset.pattern.permute.xlu0 0
        %1257 = vperm.xlu0 %1256, %v1254
        %v1258 = vpop.permute.xlu0 %1257
        %1260 = vmatprep.subr.bf16.mxu0 0
        %1261 = vmatpush1.bf16.xpose.msra.mxu0 %v1084
        %1262 = vmatprep.subr.bf16.mxu0 0
        %1263 = vmatpush1.bf16.xpose.msra.mxu0 %v1085
        %1264 = vmatprep.subr.bf16.mxu0 0
        %1265 = vmatpush1.bf16.xpose.msra.mxu0 %v1086
        %1266 = vmatprep.subr.bf16.mxu0 0
        %1267 = vmatpush1.bf16.xpose.msra.mxu0 %v1087
        %1268 = vmatprep.subr.bf16.mxu0 0
        %1269 = vmatpush1.bf16.xpose.msra.mxu0 %v1088
        %1270 = vmatprep.subr.bf16.mxu0 0
        %1271 = vmatpush1.bf16.xpose.msra.mxu0 %v1089
        %1272 = vmatprep.subr.bf16.mxu0 0
        %1273 = vmatpush1.bf16.xpose.msra.mxu0 %v1090
        %1274 = vmatprep.subr.bf16.mxu0 0
        %1275 = vmatpush1.bf16.xpose.msra.mxu0 %v1091
        %1276 = vmatprep.subr.bf16.mxu0 0
        %1277 = vmatpush1.bf16.xpose.msra.mxu0 0
        %1278 = vmatprep.subr.bf16.mxu0 0
        %1279 = vmatpush1.bf16.xpose.msra.mxu0 0
        %1280 = vmatprep.subr.bf16.mxu0 0
        %1281 = vmatpush1.bf16.xpose.msra.mxu0 0
        %1282 = vmatprep.subr.bf16.mxu0 0
        %1283 = vmatpush1.bf16.xpose.msra.mxu0 0
        %1284 = vmatprep.subr.bf16.mxu0 0
        %1285 = vmatpush1.bf16.xpose.msra.mxu0 0
        %1286 = vmatprep.subr.bf16.mxu0 0
        %1287 = vmatpush1.bf16.xpose.msra.mxu0 0
        %1288 = vmatprep.subr.bf16.mxu0 0
        %1289 = vmatpush1.bf16.xpose.msra.mxu0 0
        %1290 = vmatprep.subr.bf16.mxu0 0
        %1291 = vmatpush1.bf16.xpose.msra.mxu0 0
        %1292 = vmatprep.mubr.bf16.mxu0 0
        %1293 = vmatmul.mubr.bf16.gmra.mrb[0].mxu0 %v1253
        %v1294 = vpop.f32.mrb[0].mxu0
        %v1295 = vadd.f32 %v1258, %v1294
        %v1296 = vpop.f32.mrb[0].mxu0
        %v1297 = vpop.f32.mrb[0].mxu0
        %v1298 = vpop.f32.mrb[0].mxu0
        %1299 = vdwg.mxu0
        %v1300 = vld [vmem:[%s8] sm:$0xff]
        %v1301 = vld [vmem:[%s8 + $0x8] sm:$0xff]
        %v1302 = vld [vmem:[%s8 + $0x10] sm:$0xff]
        %v1303 = vld [vmem:[%s8 + $0x18] sm:$0xff]
        %v1304 = vld [vmem:[%s8 + $0x20] sm:$0xff]
        %v1305 = vld [vmem:[%s8 + $0x28] sm:$0xff]
        %v1306 = vld [vmem:[%s8 + $0x30] sm:$0xff]
        %v1307 = vld [vmem:[%s8 + $0x38] sm:$0xff]
        %v1308 = vld [vmem:[%s8 + $0x40] sm:$0xff]
        %v1309 = vld [vmem:[%s8 + $0x48] sm:$0xff]
        %v1310 = vld [vmem:[%s8 + $0x50] sm:$0xff]
        %v1311 = vld [vmem:[%s8 + $0x58] sm:$0xff]
        %v1312 = vld [vmem:[%s8 + $0x60] sm:$0xff]
        %v1313 = vld [vmem:[%s8 + $0x68] sm:$0xff]
        %v1314 = vld [vmem:[%s8 + $0x70] sm:$0xff]
        %v1315 = vld [vmem:[%s8 + $0x78] sm:$0xff]
        %v1316 = vld [vmem:[%s8 + $0x80] sm:$0xff]
        %v1317 = vld [vmem:[%s8 + $0x88] sm:$0xff]
        %v1318 = vld [vmem:[%s8 + $0x90] sm:$0xff]
        %v1319 = vld [vmem:[%s8 + $0x98] sm:$0xff]
        %v1320 = vld [vmem:[%s8 + $0xa0] sm:$0xff]
        %v1321 = vld [vmem:[%s8 + $0xa8] sm:$0xff]
        %v1322 = vld [vmem:[%s8 + $0xb0] sm:$0xff]
        %v1323 = vld [vmem:[%s8 + $0xb8] sm:$0xff]
        %v1324 = vld [vmem:[%s8 + $0xc0] sm:$0xff]
        %v1325 = vld [vmem:[%s8 + $0xc8] sm:$0xff]
        %v1326 = vld [vmem:[%s8 + $0xd0] sm:$0xff]
        %v1327 = vld [vmem:[%s8 + $0xd8] sm:$0xff]
        %v1328 = vld [vmem:[%s8 + $0xe0] sm:$0xff]
        %v1329 = vld [vmem:[%s8 + $0xe8] sm:$0xff]
        %v1330 = vld [vmem:[%s8 + $0xf0] sm:$0xff]
        %v1331 = vld [vmem:[%s8 + $0xf8] sm:$0xff]
        %v1364 = vunpack.c.l.b16 %v1300
        %v1365 = vunpack.c.h.b16 %v1300
        %v1366 = vunpack.c.l.b16 %v1301
        %v1367 = vunpack.c.h.b16 %v1301
        %v1368 = vunpack.c.l.b16 %v1302
        %v1369 = vunpack.c.h.b16 %v1302
        %v1370 = vunpack.c.l.b16 %v1303
        %v1371 = vunpack.c.h.b16 %v1303
        %v1372 = vunpack.c.l.b16 %v1304
        %v1373 = vunpack.c.h.b16 %v1304
        %v1374 = vunpack.c.l.b16 %v1305
        %v1375 = vunpack.c.h.b16 %v1305
        %v1376 = vunpack.c.l.b16 %v1306
        %v1377 = vunpack.c.h.b16 %v1306
        %v1378 = vunpack.c.l.b16 %v1307
        %v1379 = vunpack.c.h.b16 %v1307
        %v1380 = vunpack.c.l.b16 %v1308
        %v1381 = vunpack.c.h.b16 %v1308
        %v1382 = vunpack.c.l.b16 %v1309
        %v1383 = vunpack.c.h.b16 %v1309
        %v1384 = vunpack.c.l.b16 %v1310
        %v1385 = vunpack.c.h.b16 %v1310
        %v1386 = vunpack.c.l.b16 %v1311
        %v1387 = vunpack.c.h.b16 %v1311
        %v1388 = vunpack.c.l.b16 %v1312
        %v1389 = vunpack.c.h.b16 %v1312
        %v1390 = vunpack.c.l.b16 %v1313
        %v1391 = vunpack.c.h.b16 %v1313
        %v1392 = vunpack.c.l.b16 %v1314
        %v1393 = vunpack.c.h.b16 %v1314
        %v1394 = vunpack.c.l.b16 %v1315
        %v1395 = vunpack.c.h.b16 %v1315
        %v1396 = vunpack.c.l.b16 %v1316
        %v1397 = vunpack.c.h.b16 %v1316
        %v1398 = vunpack.c.l.b16 %v1317
        %v1399 = vunpack.c.h.b16 %v1317
        %v1400 = vunpack.c.l.b16 %v1318
        %v1401 = vunpack.c.h.b16 %v1318
        %v1402 = vunpack.c.l.b16 %v1319
        %v1403 = vunpack.c.h.b16 %v1319
        %v1404 = vunpack.c.l.b16 %v1320
        %v1405 = vunpack.c.h.b16 %v1320
        %v1406 = vunpack.c.l.b16 %v1321
        %v1407 = vunpack.c.h.b16 %v1321
        %v1408 = vunpack.c.l.b16 %v1322
        %v1409 = vunpack.c.h.b16 %v1322
        %v1410 = vunpack.c.l.b16 %v1323
        %v1411 = vunpack.c.h.b16 %v1323
        %v1412 = vunpack.c.l.b16 %v1324
        %v1413 = vunpack.c.h.b16 %v1324
        %v1414 = vunpack.c.l.b16 %v1325
        %v1415 = vunpack.c.h.b16 %v1325
        %v1416 = vunpack.c.l.b16 %v1326
        %v1417 = vunpack.c.h.b16 %v1326
        %v1418 = vunpack.c.l.b16 %v1327
        %v1419 = vunpack.c.h.b16 %v1327
        %v1420 = vunpack.c.l.b16 %v1328
        %v1421 = vunpack.c.h.b16 %v1328
        %v1422 = vunpack.c.l.b16 %v1329
        %v1423 = vunpack.c.h.b16 %v1329
        %v1424 = vunpack.c.l.b16 %v1330
        %v1425 = vunpack.c.h.b16 %v1330
        %v1426 = vunpack.c.l.b16 %v1331
        %v1427 = vunpack.c.h.b16 %v1331
        %v1428 = vpack.c.b16 %v1368, %v1364
        %v1429 = vpack.c.b16 %v1369, %v1365
        %v1430 = vpack.c.b16 %v1370, %v1366
        %v1431 = vpack.c.b16 %v1371, %v1367
        %v1432 = vpack.c.b16 %v1376, %v1372
        %v1433 = vpack.c.b16 %v1377, %v1373
        %v1434 = vpack.c.b16 %v1378, %v1374
        %v1435 = vpack.c.b16 %v1379, %v1375
        %v1436 = vpack.c.b16 %v1384, %v1380
        %v1437 = vpack.c.b16 %v1385, %v1381
        %v1438 = vpack.c.b16 %v1386, %v1382
        %v1439 = vpack.c.b16 %v1387, %v1383
        %v1440 = vpack.c.b16 %v1392, %v1388
        %v1441 = vpack.c.b16 %v1393, %v1389
        %v1442 = vpack.c.b16 %v1394, %v1390
        %v1443 = vpack.c.b16 %v1395, %v1391
        %v1444 = vpack.c.b16 %v1400, %v1396
        %v1445 = vpack.c.b16 %v1401, %v1397
        %v1446 = vpack.c.b16 %v1402, %v1398
        %v1447 = vpack.c.b16 %v1403, %v1399
        %v1448 = vpack.c.b16 %v1408, %v1404
        %v1449 = vpack.c.b16 %v1409, %v1405
        %v1450 = vpack.c.b16 %v1410, %v1406
        %v1451 = vpack.c.b16 %v1411, %v1407
        %v1452 = vpack.c.b16 %v1416, %v1412
        %v1453 = vpack.c.b16 %v1417, %v1413
        %v1454 = vpack.c.b16 %v1418, %v1414
        %v1455 = vpack.c.b16 %v1419, %v1415
        %v1456 = vpack.c.b16 %v1424, %v1420
        %v1457 = vpack.c.b16 %v1425, %v1421
        %v1458 = vpack.c.b16 %v1426, %v1422
        %v1459 = vpack.c.b16 %v1427, %v1423
        %1492 = vmatprep.subr.bf16.mxu0 %v1429
        %1493 = vmatpush1.bf16.msra.mxu0 %v1428
        %1494 = vmatprep.subr.bf16.mxu0 %v1433
        %1495 = vmatpush1.bf16.msra.mxu0 %v1432
        %1496 = vmatprep.subr.bf16.mxu0 %v1437
        %1497 = vmatpush1.bf16.msra.mxu0 %v1436
        %1498 = vmatprep.subr.bf16.mxu0 %v1441
        %1499 = vmatpush1.bf16.msra.mxu0 %v1440
        %1500 = vmatprep.subr.bf16.mxu0 %v1445
        %1501 = vmatpush1.bf16.msra.mxu0 %v1444
        %1502 = vmatprep.subr.bf16.mxu0 %v1449
        %1503 = vmatpush1.bf16.msra.mxu0 %v1448
        %1504 = vmatprep.subr.bf16.mxu0 %v1453
        %1505 = vmatpush1.bf16.msra.mxu0 %v1452
        %1506 = vmatprep.subr.bf16.mxu0 %v1457
        %1507 = vmatpush1.bf16.msra.mxu0 %v1456
        %1508 = vmatprep.subr.bf16.mxu0 0
        %1509 = vmatpush1.bf16.msra.mxu0 0
        %1510 = vmatprep.subr.bf16.mxu0 0
        %1511 = vmatpush1.bf16.msra.mxu0 0
        %1512 = vmatprep.subr.bf16.mxu0 0
        %1513 = vmatpush1.bf16.msra.mxu0 0
        %1514 = vmatprep.subr.bf16.mxu0 0
        %1515 = vmatpush1.bf16.msra.mxu0 0
        %1516 = vmatprep.subr.bf16.mxu0 0
        %1517 = vmatpush1.bf16.msra.mxu0 0
        %1518 = vmatprep.subr.bf16.mxu0 0
        %1519 = vmatpush1.bf16.msra.mxu0 0
        %1520 = vmatprep.subr.bf16.mxu0 0
        %1521 = vmatpush1.bf16.msra.mxu0 0
        %1522 = vmatprep.subr.bf16.mxu0 0
        %1523 = vmatpush1.bf16.msra.mxu0 0
        %1524 = vmatprep.mubr.bf16.mxu0 0
        %1525 = vmatmul.mubr.bf16.gmra.mrb[0].mxu0 %v1076
        %v1526 = vpop.f32.mrb[0].mxu0
        %v1527 = vadd.f32 0.0, %v1526
        %v1528 = vpop.f32.mrb[0].mxu0
        %v1529 = vadd.f32 0.0, %v1528
        %v1530 = vpop.f32.mrb[0].mxu0
        %v1531 = vadd.f32 0.0, %v1530
        %v1532 = vpop.f32.mrb[0].mxu0
        %v1533 = vadd.f32 0.0, %v1532
        %1534 = vmatprep.mubr.bf16.mxu0 0
        %1535 = vmatmul.mubr.bf16.gmra.mrb[0].mxu0 %v1077
        %v1536 = vpop.f32.mrb[0].mxu0
        %v1537 = vadd.f32 0.0, %v1536
        %v1538 = vpop.f32.mrb[0].mxu0
        %v1539 = vadd.f32 0.0, %v1538
        %v1540 = vpop.f32.mrb[0].mxu0
        %v1541 = vadd.f32 0.0, %v1540
        %v1542 = vpop.f32.mrb[0].mxu0
        %v1543 = vadd.f32 0.0, %v1542
        %1544 = vmatprep.mubr.bf16.mxu0 0
        %1545 = vmatmul.mubr.bf16.gmra.mrb[0].mxu0 %v1078
        %v1546 = vpop.f32.mrb[0].mxu0
        %v1547 = vadd.f32 0.0, %v1546
        %v1548 = vpop.f32.mrb[0].mxu0
        %v1549 = vadd.f32 0.0, %v1548
        %v1550 = vpop.f32.mrb[0].mxu0
        %v1551 = vadd.f32 0.0, %v1550
        %v1552 = vpop.f32.mrb[0].mxu0
        %v1553 = vadd.f32 0.0, %v1552
        %1554 = vmatprep.mubr.bf16.mxu0 0
        %1555 = vmatmul.mubr.bf16.gmra.mrb[0].mxu0 %v1079
        %v1556 = vpop.f32.mrb[0].mxu0
        %v1557 = vadd.f32 0.0, %v1556
        %v1558 = vpop.f32.mrb[0].mxu0
        %v1559 = vadd.f32 0.0, %v1558
        %v1560 = vpop.f32.mrb[0].mxu0
        %v1561 = vadd.f32 0.0, %v1560
        %v1562 = vpop.f32.mrb[0].mxu0
        %v1563 = vadd.f32 0.0, %v1562
        %1564 = vmatprep.mubr.bf16.mxu0 0
        %1565 = vmatmul.mubr.bf16.gmra.mrb[0].mxu0 %v1080
        %v1566 = vpop.f32.mrb[0].mxu0
        %v1567 = vadd.f32 0.0, %v1566
        %v1568 = vpop.f32.mrb[0].mxu0
        %v1569 = vadd.f32 0.0, %v1568
        %v1570 = vpop.f32.mrb[0].mxu0
        %v1571 = vadd.f32 0.0, %v1570
        %v1572 = vpop.f32.mrb[0].mxu0
        %v1573 = vadd.f32 0.0, %v1572
        %1574 = vmatprep.mubr.bf16.mxu0 0
        %1575 = vmatmul.mubr.bf16.gmra.mrb[0].mxu0 %v1081
        %v1576 = vpop.f32.mrb[0].mxu0
        %v1577 = vadd.f32 0.0, %v1576
        %v1578 = vpop.f32.mrb[0].mxu0
        %v1579 = vadd.f32 0.0, %v1578
        %v1580 = vpop.f32.mrb[0].mxu0
        %v1581 = vadd.f32 0.0, %v1580
        %v1582 = vpop.f32.mrb[0].mxu0
        %v1583 = vadd.f32 0.0, %v1582
        %1584 = vmatprep.mubr.bf16.mxu0 0
        %1585 = vmatmul.mubr.bf16.gmra.mrb[0].mxu0 %v1082
        %v1586 = vpop.f32.mrb[0].mxu0
        %v1587 = vadd.f32 0.0, %v1586
        %v1588 = vpop.f32.mrb[0].mxu0
        %v1589 = vadd.f32 0.0, %v1588
        %v1590 = vpop.f32.mrb[0].mxu0
        %v1591 = vadd.f32 0.0, %v1590
        %v1592 = vpop.f32.mrb[0].mxu0
        %v1593 = vadd.f32 0.0, %v1592
        %1594 = vmatprep.mubr.bf16.mxu0 0
        %1595 = vmatmul.mubr.bf16.gmra.mrb[0].mxu0 %v1083
        %v1596 = vpop.f32.mrb[0].mxu0
        %v1597 = vadd.f32 0.0, %v1596
        %v1598 = vpop.f32.mrb[0].mxu0
        %v1599 = vadd.f32 0.0, %v1598
        %v1600 = vpop.f32.mrb[0].mxu0
        %v1601 = vadd.f32 0.0, %v1600
        %v1602 = vpop.f32.mrb[0].mxu0
        %v1603 = vadd.f32 0.0, %v1602
        %1604 = vdwg.mxu0
        %1605 = vmatprep.subr.bf16.mxu0 %v1431
        %1606 = vmatpush1.bf16.msra.mxu0 %v1430
        %1607 = vmatprep.subr.bf16.mxu0 %v1435
        %1608 = vmatpush1.bf16.msra.mxu0 %v1434
        %1609 = vmatprep.subr.bf16.mxu0 %v1439
        %1610 = vmatpush1.bf16.msra.mxu0 %v1438
        %1611 = vmatprep.subr.bf16.mxu0 %v1443
        %1612 = vmatpush1.bf16.msra.mxu0 %v1442
        %1613 = vmatprep.subr.bf16.mxu0 %v1447
        %1614 = vmatpush1.bf16.msra.mxu0 %v1446
        %1615 = vmatprep.subr.bf16.mxu0 %v1451
        %1616 = vmatpush1.bf16.msra.mxu0 %v1450
        %1617 = vmatprep.subr.bf16.mxu0 %v1455
        %1618 = vmatpush1.bf16.msra.mxu0 %v1454
        %1619 = vmatprep.subr.bf16.mxu0 %v1459
        %1620 = vmatpush1.bf16.msra.mxu0 %v1458
        %1621 = vmatprep.subr.bf16.mxu0 0
        %1622 = vmatpush1.bf16.msra.mxu0 0
        %1623 = vmatprep.subr.bf16.mxu0 0
        %1624 = vmatpush1.bf16.msra.mxu0 0
        %1625 = vmatprep.subr.bf16.mxu0 0
        %1626 = vmatpush1.bf16.msra.mxu0 0
        %1627 = vmatprep.subr.bf16.mxu0 0
        %1628 = vmatpush1.bf16.msra.mxu0 0
        %1629 = vmatprep.subr.bf16.mxu0 0
        %1630 = vmatpush1.bf16.msra.mxu0 0
        %1631 = vmatprep.subr.bf16.mxu0 0
        %1632 = vmatpush1.bf16.msra.mxu0 0
        %1633 = vmatprep.subr.bf16.mxu0 0
        %1634 = vmatpush1.bf16.msra.mxu0 0
        %1635 = vmatprep.subr.bf16.mxu0 0
        %1636 = vmatpush1.bf16.msra.mxu0 0
        %1637 = vmatprep.mubr.bf16.mxu0 0
        %1638 = vmatmul.mubr.bf16.gmra.mrb[0].mxu0 %v1076
        %v1639 = vpop.f32.mrb[0].mxu0
        %v1640 = vadd.f32 0.0, %v1639
        %v1641 = vpop.f32.mrb[0].mxu0
        %v1642 = vadd.f32 0.0, %v1641
        %v1643 = vpop.f32.mrb[0].mxu0
        %v1644 = vadd.f32 0.0, %v1643
        %v1645 = vpop.f32.mrb[0].mxu0
        %v1646 = vadd.f32 0.0, %v1645
        %1647 = vmatprep.mubr.bf16.mxu0 0
        %1648 = vmatmul.mubr.bf16.gmra.mrb[0].mxu0 %v1077
        %v1649 = vpop.f32.mrb[0].mxu0
        %v1650 = vadd.f32 0.0, %v1649
        %v1651 = vpop.f32.mrb[0].mxu0
        %v1652 = vadd.f32 0.0, %v1651
        %v1653 = vpop.f32.mrb[0].mxu0
        %v1654 = vadd.f32 0.0, %v1653
        %v1655 = vpop.f32.mrb[0].mxu0
        %v1656 = vadd.f32 0.0, %v1655
        %1657 = vmatprep.mubr.bf16.mxu0 0
        %1658 = vmatmul.mubr.bf16.gmra.mrb[0].mxu0 %v1078
        %v1659 = vpop.f32.mrb[0].mxu0
        %v1660 = vadd.f32 0.0, %v1659
        %v1661 = vpop.f32.mrb[0].mxu0
        %v1662 = vadd.f32 0.0, %v1661
        %v1663 = vpop.f32.mrb[0].mxu0
        %v1664 = vadd.f32 0.0, %v1663
        %v1665 = vpop.f32.mrb[0].mxu0
        %v1666 = vadd.f32 0.0, %v1665
        %1667 = vmatprep.mubr.bf16.mxu0 0
        %1668 = vmatmul.mubr.bf16.gmra.mrb[0].mxu0 %v1079
        %v1669 = vpop.f32.mrb[0].mxu0
        %v1670 = vadd.f32 0.0, %v1669
        %v1671 = vpop.f32.mrb[0].mxu0
        %v1672 = vadd.f32 0.0, %v1671
        %v1673 = vpop.f32.mrb[0].mxu0
        %v1674 = vadd.f32 0.0, %v1673
        %v1675 = vpop.f32.mrb[0].mxu0
        %v1676 = vadd.f32 0.0, %v1675
        %1677 = vmatprep.mubr.bf16.mxu0 0
        %1678 = vmatmul.mubr.bf16.gmra.mrb[0].mxu0 %v1080
        %v1679 = vpop.f32.mrb[0].mxu0
        %v1680 = vadd.f32 0.0, %v1679
        %v1681 = vpop.f32.mrb[0].mxu0
        %v1682 = vadd.f32 0.0, %v1681
        %v1683 = vpop.f32.mrb[0].mxu0
        %v1684 = vadd.f32 0.0, %v1683
        %v1685 = vpop.f32.mrb[0].mxu0
        %v1686 = vadd.f32 0.0, %v1685
        %1687 = vmatprep.mubr.bf16.mxu0 0
        %1688 = vmatmul.mubr.bf16.gmra.mrb[0].mxu0 %v1081
        %v1689 = vpop.f32.mrb[0].mxu0
        %v1690 = vadd.f32 0.0, %v1689
        %v1691 = vpop.f32.mrb[0].mxu0
        %v1692 = vadd.f32 0.0, %v1691
        %v1693 = vpop.f32.mrb[0].mxu0
        %v1694 = vadd.f32 0.0, %v1693
        %v1695 = vpop.f32.mrb[0].mxu0
        %v1696 = vadd.f32 0.0, %v1695
        %1697 = vmatprep.mubr.bf16.mxu0 0
        %1698 = vmatmul.mubr.bf16.gmra.mrb[0].mxu0 %v1082
        %v1699 = vpop.f32.mrb[0].mxu0
        %v1700 = vadd.f32 0.0, %v1699
        %v1701 = vpop.f32.mrb[0].mxu0
        %v1702 = vadd.f32 0.0, %v1701
        %v1703 = vpop.f32.mrb[0].mxu0
        %v1704 = vadd.f32 0.0, %v1703
        %v1705 = vpop.f32.mrb[0].mxu0
        %v1706 = vadd.f32 0.0, %v1705
        %1707 = vmatprep.mubr.bf16.mxu0 0
        %1708 = vmatmul.mubr.bf16.gmra.mrb[0].mxu0 %v1083
        %v1709 = vpop.f32.mrb[0].mxu0
        %v1710 = vadd.f32 0.0, %v1709
        %v1711 = vpop.f32.mrb[0].mxu0
        %v1712 = vadd.f32 0.0, %v1711
        %v1713 = vpop.f32.mrb[0].mxu0
        %v1714 = vadd.f32 0.0, %v1713
        %v1715 = vpop.f32.mrb[0].mxu0
        %v1716 = vadd.f32 0.0, %v1715
        %1717 = vdwg.mxu0
        %v1718 = vpack.c.bf16 %v1531, %v1527
        %v1719 = vpack.c.bf16 %v1533, %v1529
        %v1720 = vpack.c.bf16 %v1644, %v1640
        %v1721 = vpack.c.bf16 %v1646, %v1642
        %v1722 = vpack.c.bf16 %v1541, %v1537
        %v1723 = vpack.c.bf16 %v1543, %v1539
        %v1724 = vpack.c.bf16 %v1654, %v1650
        %v1725 = vpack.c.bf16 %v1656, %v1652
        %v1726 = vpack.c.bf16 %v1551, %v1547
        %v1727 = vpack.c.bf16 %v1553, %v1549
        %v1728 = vpack.c.bf16 %v1664, %v1660
        %v1729 = vpack.c.bf16 %v1666, %v1662
        %v1730 = vpack.c.bf16 %v1561, %v1557
        %v1731 = vpack.c.bf16 %v1563, %v1559
        %v1732 = vpack.c.bf16 %v1674, %v1670
        %v1733 = vpack.c.bf16 %v1676, %v1672
        %v1734 = vpack.c.bf16 %v1571, %v1567
        %v1735 = vpack.c.bf16 %v1573, %v1569
        %v1736 = vpack.c.bf16 %v1684, %v1680
        %v1737 = vpack.c.bf16 %v1686, %v1682
        %v1738 = vpack.c.bf16 %v1581, %v1577
        %v1739 = vpack.c.bf16 %v1583, %v1579
        %v1740 = vpack.c.bf16 %v1694, %v1690
        %v1741 = vpack.c.bf16 %v1696, %v1692
        %v1742 = vpack.c.bf16 %v1591, %v1587
        %v1743 = vpack.c.bf16 %v1593, %v1589
        %v1744 = vpack.c.bf16 %v1704, %v1700
        %v1745 = vpack.c.bf16 %v1706, %v1702
        %v1746 = vpack.c.bf16 %v1601, %v1597
        %v1747 = vpack.c.bf16 %v1603, %v1599
        %v1748 = vpack.c.bf16 %v1714, %v1710
        %v1749 = vpack.c.bf16 %v1716, %v1712
        %v1750 = vld [vmem:[%s501] sm:$0x1]
        %v1751 = vld [vmem:[%s510] sm:$0xff]
        %v1752 = vld [vmem:[%s510 + $0x8] sm:$0xff]
        %v1753 = vld [vmem:[%s510 + $0x10] sm:$0xff]
        %v1754 = vld [vmem:[%s510 + $0x18] sm:$0xff]
        %v1755 = vld [vmem:[%s510 + $0x20] sm:$0xff]
        %v1756 = vld [vmem:[%s510 + $0x28] sm:$0xff]
        %v1757 = vld [vmem:[%s510 + $0x30] sm:$0xff]
        %v1758 = vld [vmem:[%s510 + $0x38] sm:$0xff]
        %v1759 = vld [vmem:[%s510 + $0x40] sm:$0xff]
        %v1760 = vld [vmem:[%s510 + $0x48] sm:$0xff]
        %v1761 = vld [vmem:[%s510 + $0x50] sm:$0xff]
        %v1762 = vld [vmem:[%s510 + $0x58] sm:$0xff]
        %v1763 = vld [vmem:[%s510 + $0x60] sm:$0xff]
        %v1764 = vld [vmem:[%s510 + $0x68] sm:$0xff]
        %v1765 = vld [vmem:[%s510 + $0x70] sm:$0xff]
        %v1766 = vld [vmem:[%s510 + $0x78] sm:$0xff]
        %v1767 = vsub.f32 1.0, %v1750
        %v1769 = vlaneseq
        %v1770 = vshrl.u32 %v1769, 7
        %v1771 = vsub.s32 0, %v1770
        %v1772 = vrot.slane %v1750, %v1771
        %1775 = vset.pattern.permute.xlu0 0
        %1776 = vperm.xlu0 %1775, %v1751
        %v1777 = vpop.permute.xlu0 %1776
        %1780 = vset.pattern.permute.xlu0 0
        %1781 = vperm.xlu0 %1780, %v1752
        %v1782 = vpop.permute.xlu0 %1781
        %1785 = vset.pattern.permute.xlu0 0
        %1786 = vperm.xlu0 %1785, %v1753
        %v1787 = vpop.permute.xlu0 %1786
        %1790 = vset.pattern.permute.xlu0 0
        %1791 = vperm.xlu0 %1790, %v1754
        %v1792 = vpop.permute.xlu0 %1791
        %1795 = vset.pattern.permute.xlu0 0
        %1796 = vperm.xlu0 %1795, %v1755
        %v1797 = vpop.permute.xlu0 %1796
        %1800 = vset.pattern.permute.xlu0 0
        %1801 = vperm.xlu0 %1800, %v1756
        %v1802 = vpop.permute.xlu0 %1801
        %1805 = vset.pattern.permute.xlu0 0
        %1806 = vperm.xlu0 %1805, %v1757
        %v1807 = vpop.permute.xlu0 %1806
        %1810 = vset.pattern.permute.xlu0 0
        %1811 = vperm.xlu0 %1810, %v1758
        %v1812 = vpop.permute.xlu0 %1811
        %1815 = vset.pattern.permute.xlu0 0
        %1816 = vperm.xlu0 %1815, %v1759
        %v1817 = vpop.permute.xlu0 %1816
        %1820 = vset.pattern.permute.xlu0 0
        %1821 = vperm.xlu0 %1820, %v1760
        %v1822 = vpop.permute.xlu0 %1821
        %1825 = vset.pattern.permute.xlu0 0
        %1826 = vperm.xlu0 %1825, %v1761
        %v1827 = vpop.permute.xlu0 %1826
        %1830 = vset.pattern.permute.xlu0 0
        %1831 = vperm.xlu0 %1830, %v1762
        %v1832 = vpop.permute.xlu0 %1831
        %1835 = vset.pattern.permute.xlu0 0
        %1836 = vperm.xlu0 %1835, %v1763
        %v1837 = vpop.permute.xlu0 %1836
        %1840 = vset.pattern.permute.xlu0 0
        %1841 = vperm.xlu0 %1840, %v1764
        %v1842 = vpop.permute.xlu0 %1841
        %1845 = vset.pattern.permute.xlu0 0
        %1846 = vperm.xlu0 %1845, %v1765
        %v1847 = vpop.permute.xlu0 %1846
        %1850 = vset.pattern.permute.xlu0 0
        %1851 = vperm.xlu0 %1850, %v1766
        %v1852 = vpop.permute.xlu0 %1851
        %v1854 = vmul.f32 %v1772, %v1777
        %v1855 = vmul.f32 %v1772, %v1782
        %v1856 = vmul.f32 %v1772, %v1787
        %v1857 = vmul.f32 %v1772, %v1792
        %v1858 = vmul.f32 %v1772, %v1797
        %v1859 = vmul.f32 %v1772, %v1802
        %v1860 = vmul.f32 %v1772, %v1807
        %v1861 = vmul.f32 %v1772, %v1812
        %v1862 = vmul.f32 %v1772, %v1817
        %v1863 = vmul.f32 %v1772, %v1822
        %v1864 = vmul.f32 %v1772, %v1827
        %v1865 = vmul.f32 %v1772, %v1832
        %v1866 = vmul.f32 %v1772, %v1837
        %v1867 = vmul.f32 %v1772, %v1842
        %v1868 = vmul.f32 %v1772, %v1847
        %v1869 = vmul.f32 %v1772, %v1852
        %v1870 = vsub.f32 1.0, %v1854
        %v1871 = vsub.f32 1.0, %v1855
        %v1872 = vsub.f32 1.0, %v1856
        %v1873 = vsub.f32 1.0, %v1857
        %v1874 = vsub.f32 1.0, %v1858
        %v1875 = vsub.f32 1.0, %v1859
        %v1876 = vsub.f32 1.0, %v1860
        %v1877 = vsub.f32 1.0, %v1861
        %v1878 = vsub.f32 1.0, %v1862
        %v1879 = vsub.f32 1.0, %v1863
        %v1880 = vsub.f32 1.0, %v1864
        %v1881 = vsub.f32 1.0, %v1865
        %v1882 = vsub.f32 1.0, %v1866
        %v1883 = vsub.f32 1.0, %v1867
        %v1884 = vsub.f32 1.0, %v1868
        %v1885 = vsub.f32 1.0, %v1869
        %v1887 = vlaneseq
        %v1888 = vshrl.u32 %v1887, 7
        %v1889 = vsub.s32 0, %v1888
        %v1890 = vrot.slane %v1767, %v1889
        %v1892 = vadd.f32 %v1890, %v1870
        %v1893 = vadd.f32 %v1890, %v1871
        %v1894 = vadd.f32 %v1890, %v1872
        %v1895 = vadd.f32 %v1890, %v1873
        %v1896 = vadd.f32 %v1890, %v1874
        %v1897 = vadd.f32 %v1890, %v1875
        %v1898 = vadd.f32 %v1890, %v1876
        %v1899 = vadd.f32 %v1890, %v1877
        %v1900 = vadd.f32 %v1890, %v1878
        %v1901 = vadd.f32 %v1890, %v1879
        %v1902 = vadd.f32 %v1890, %v1880
        %v1903 = vadd.f32 %v1890, %v1881
        %v1904 = vadd.f32 %v1890, %v1882
        %v1905 = vadd.f32 %v1890, %v1883
        %v1906 = vadd.f32 %v1890, %v1884
        %v1907 = vadd.f32 %v1890, %v1885
        %v1908 = vmul.f32 %v1892, -1e+12
        %v1909 = vmul.f32 %v1893, -1e+12
        %v1910 = vmul.f32 %v1894, -1e+12
        %v1911 = vmul.f32 %v1895, -1e+12
        %v1912 = vmul.f32 %v1896, -1e+12
        %v1913 = vmul.f32 %v1897, -1e+12
        %v1914 = vmul.f32 %v1898, -1e+12
        %v1915 = vmul.f32 %v1899, -1e+12
        %v1916 = vmul.f32 %v1900, -1e+12
        %v1917 = vmul.f32 %v1901, -1e+12
        %v1918 = vmul.f32 %v1902, -1e+12
        %v1919 = vmul.f32 %v1903, -1e+12
        %v1920 = vmul.f32 %v1904, -1e+12
        %v1921 = vmul.f32 %v1905, -1e+12
        %v1922 = vmul.f32 %v1906, -1e+12
        %v1923 = vmul.f32 %v1907, -1e+12
        %1925 = vset.pattern.permute.xlu0 0
        %1926 = vperm.xlu0 %1925, %v1191
        %v1927 = vpop.permute.xlu0 %1926
        %1930 = vset.pattern.permute.xlu0 0
        %1931 = vperm.xlu0 %1930, %v1194
        %v1932 = vpop.permute.xlu0 %1931
        %1935 = vset.pattern.permute.xlu0 0
        %1936 = vperm.xlu0 %1935, %v1199
        %v1937 = vpop.permute.xlu0 %1936
        %1940 = vset.pattern.permute.xlu0 0
        %1941 = vperm.xlu0 %1940, %v1202
        %v1942 = vpop.permute.xlu0 %1941
        %1945 = vset.pattern.permute.xlu0 0
        %1946 = vperm.xlu0 %1945, %v1207
        %v1947 = vpop.permute.xlu0 %1946
        %1950 = vset.pattern.permute.xlu0 0
        %1951 = vperm.xlu0 %1950, %v1210
        %v1952 = vpop.permute.xlu0 %1951
        %1955 = vset.pattern.permute.xlu0 0
        %1956 = vperm.xlu0 %1955, %v1215
        %v1957 = vpop.permute.xlu0 %1956
        %1960 = vset.pattern.permute.xlu0 0
        %1961 = vperm.xlu0 %1960, %v1218
        %v1962 = vpop.permute.xlu0 %1961
        %1965 = vset.pattern.permute.xlu0 0
        %1966 = vperm.xlu0 %1965, %v1223
        %v1967 = vpop.permute.xlu0 %1966
        %1970 = vset.pattern.permute.xlu0 0
        %1971 = vperm.xlu0 %1970, %v1226
        %v1972 = vpop.permute.xlu0 %1971
        %1975 = vset.pattern.permute.xlu0 0
        %1976 = vperm.xlu0 %1975, %v1231
        %v1977 = vpop.permute.xlu0 %1976
        %1980 = vset.pattern.permute.xlu0 0
        %1981 = vperm.xlu0 %1980, %v1234
        %v1982 = vpop.permute.xlu0 %1981
        %1985 = vset.pattern.permute.xlu0 0
        %1986 = vperm.xlu0 %1985, %v1239
        %v1987 = vpop.permute.xlu0 %1986
        %1990 = vset.pattern.permute.xlu0 0
        %1991 = vperm.xlu0 %1990, %v1242
        %v1992 = vpop.permute.xlu0 %1991
        %1995 = vset.pattern.permute.xlu0 0
        %1996 = vperm.xlu0 %1995, %v1247
        %v1997 = vpop.permute.xlu0 %1996
        %2000 = vset.pattern.permute.xlu0 0
        %2001 = vperm.xlu0 %2000, %v1250
        %v2002 = vpop.permute.xlu0 %2001
        %2004 = vmatprep.subr.bf16.mxu0 0
        %2005 = vmatpush1.bf16.xpose.msra.mxu0 %v1084
        %2006 = vmatprep.subr.bf16.mxu0 0
        %2007 = vmatpush1.bf16.xpose.msra.mxu0 %v1085
        %2008 = vmatprep.subr.bf16.mxu0 0
        %2009 = vmatpush1.bf16.xpose.msra.mxu0 %v1086
        %2010 = vmatprep.subr.bf16.mxu0 0
        %2011 = vmatpush1.bf16.xpose.msra.mxu0 %v1087
        %2012 = vmatprep.subr.bf16.mxu0 0
        %2013 = vmatpush1.bf16.xpose.msra.mxu0 %v1088
        %2014 = vmatprep.subr.bf16.mxu0 0
        %2015 = vmatpush1.bf16.xpose.msra.mxu0 %v1089
        %2016 = vmatprep.subr.bf16.mxu0 0
        %2017 = vmatpush1.bf16.xpose.msra.mxu0 %v1090
        %2018 = vmatprep.subr.bf16.mxu0 0
        %2019 = vmatpush1.bf16.xpose.msra.mxu0 %v1091
        %2020 = vmatprep.subr.bf16.mxu0 0
        %2021 = vmatpush1.bf16.xpose.msra.mxu0 0
        %2022 = vmatprep.subr.bf16.mxu0 0
        %2023 = vmatpush1.bf16.xpose.msra.mxu0 0
        %2024 = vmatprep.subr.bf16.mxu0 0
        %2025 = vmatpush1.bf16.xpose.msra.mxu0 0
        %2026 = vmatprep.subr.bf16.mxu0 0
        %2027 = vmatpush1.bf16.xpose.msra.mxu0 0
        %2028 = vmatprep.subr.bf16.mxu0 0
        %2029 = vmatpush1.bf16.xpose.msra.mxu0 0
        %2030 = vmatprep.subr.bf16.mxu0 0
        %2031 = vmatpush1.bf16.xpose.msra.mxu0 0
        %2032 = vmatprep.subr.bf16.mxu0 0
        %2033 = vmatpush1.bf16.xpose.msra.mxu0 0
        %2034 = vmatprep.subr.bf16.mxu0 0
        %2035 = vmatpush1.bf16.xpose.msra.mxu0 0
        %2036 = vmatprep.mubr.bf16.mxu0 0
        %2037 = vmatmul.mubr.bf16.gmra.mrb[0].mxu0 %v1718
        %v2038 = vpop.f32.mrb[0].mxu0
        %v2039 = vadd.f32 %v1927, %v2038
        %v2040 = vpop.f32.mrb[0].mxu0
        %v2041 = vpop.f32.mrb[0].mxu0
        %v2042 = vadd.f32 %v1932, %v2041
        %v2043 = vpop.f32.mrb[0].mxu0
        %2044 = vmatprep.mubr.bf16.mxu0 0
        %2045 = vmatmul.mubr.bf16.gmra.mrb[0].mxu0 %v1722
        %v2046 = vpop.f32.mrb[0].mxu0
        %v2047 = vadd.f32 %v1937, %v2046
        %v2048 = vpop.f32.mrb[0].mxu0
        %v2049 = vpop.f32.mrb[0].mxu0
        %v2050 = vadd.f32 %v1942, %v2049
        %v2051 = vpop.f32.mrb[0].mxu0
        %2052 = vmatprep.mubr.bf16.mxu0 0
        %2053 = vmatmul.mubr.bf16.gmra.mrb[0].mxu0 %v1726
        %v2054 = vpop.f32.mrb[0].mxu0
        %v2055 = vadd.f32 %v1947, %v2054
        %v2056 = vpop.f32.mrb[0].mxu0
        %v2057 = vpop.f32.mrb[0].mxu0
        %v2058 = vadd.f32 %v1952, %v2057
        %v2059 = vpop.f32.mrb[0].mxu0
        %2060 = vmatprep.mubr.bf16.mxu0 0
        %2061 = vmatmul.mubr.bf16.gmra.mrb[0].mxu0 %v1730
        %v2062 = vpop.f32.mrb[0].mxu0
        %v2063 = vadd.f32 %v1957, %v2062
        %v2064 = vpop.f32.mrb[0].mxu0
        %v2065 = vpop.f32.mrb[0].mxu0
        %v2066 = vadd.f32 %v1962, %v2065
        %v2067 = vpop.f32.mrb[0].mxu0
        %2068 = vmatprep.mubr.bf16.mxu0 0
        %2069 = vmatmul.mubr.bf16.gmra.mrb[0].mxu0 %v1734
        %v2070 = vpop.f32.mrb[0].mxu0
        %v2071 = vadd.f32 %v1967, %v2070
        %v2072 = vpop.f32.mrb[0].mxu0
        %v2073 = vpop.f32.mrb[0].mxu0
        %v2074 = vadd.f32 %v1972, %v2073
        %v2075 = vpop.f32.mrb[0].mxu0
        %2076 = vmatprep.mubr.bf16.mxu0 0
        %2077 = vmatmul.mubr.bf16.gmra.mrb[0].mxu0 %v1738
        %v2078 = vpop.f32.mrb[0].mxu0
        %v2079 = vadd.f32 %v1977, %v2078
        %v2080 = vpop.f32.mrb[0].mxu0
        %v2081 = vpop.f32.mrb[0].mxu0
        %v2082 = vadd.f32 %v1982, %v2081
        %v2083 = vpop.f32.mrb[0].mxu0
        %2084 = vmatprep.mubr.bf16.mxu0 0
        %2085 = vmatmul.mubr.bf16.gmra.mrb[0].mxu0 %v1742
        %v2086 = vpop.f32.mrb[0].mxu0
        %v2087 = vadd.f32 %v1987, %v2086
        %v2088 = vpop.f32.mrb[0].mxu0
        %v2089 = vpop.f32.mrb[0].mxu0
        %v2090 = vadd.f32 %v1992, %v2089
        %v2091 = vpop.f32.mrb[0].mxu0
        %2092 = vmatprep.mubr.bf16.mxu0 0
        %2093 = vmatmul.mubr.bf16.gmra.mrb[0].mxu0 %v1746
        %v2094 = vpop.f32.mrb[0].mxu0
        %v2095 = vadd.f32 %v1997, %v2094
        %v2096 = vpop.f32.mrb[0].mxu0
        %v2097 = vpop.f32.mrb[0].mxu0
        %v2098 = vadd.f32 %v2002, %v2097
        %v2099 = vpop.f32.mrb[0].mxu0
        %2100 = vdwg.mxu0
        %v2101 = vlaneseq
        %v2102 = vshrl.u32 %v2101, 7
        %v2103 = vsub.s32 0, %v2102
        %v2104 = vrot.slane %v1295, %v2103
        %v2105 = vadd.f32 %v2039, %v2104
        %v2106 = vadd.f32 %v2042, %v2104
        %v2107 = vadd.f32 %v2047, %v2104
        %v2108 = vadd.f32 %v2050, %v2104
        %v2109 = vadd.f32 %v2055, %v2104
        %v2110 = vadd.f32 %v2058, %v2104
        %v2111 = vadd.f32 %v2063, %v2104
        %v2112 = vadd.f32 %v2066, %v2104
        %v2113 = vadd.f32 %v2071, %v2104
        %v2114 = vadd.f32 %v2074, %v2104
        %v2115 = vadd.f32 %v2079, %v2104
        %v2116 = vadd.f32 %v2082, %v2104
        %v2117 = vadd.f32 %v2087, %v2104
        %v2118 = vadd.f32 %v2090, %v2104
        %v2119 = vadd.f32 %v2095, %v2104
        %v2120 = vadd.f32 %v2098, %v2104
        %v2121 = vmul.f32 %v2105, %v1772
        %v2122 = vmul.f32 %v2106, %v1772
        %v2123 = vmul.f32 %v2107, %v1772
        %v2124 = vmul.f32 %v2108, %v1772
        %v2125 = vmul.f32 %v2109, %v1772
        %v2126 = vmul.f32 %v2110, %v1772
        %v2127 = vmul.f32 %v2111, %v1772
        %v2128 = vmul.f32 %v2112, %v1772
        %v2129 = vmul.f32 %v2113, %v1772
        %v2130 = vmul.f32 %v2114, %v1772
        %v2131 = vmul.f32 %v2115, %v1772
        %v2132 = vmul.f32 %v2116, %v1772
        %v2133 = vmul.f32 %v2117, %v1772
        %v2134 = vmul.f32 %v2118, %v1772
        %v2135 = vmul.f32 %v2119, %v1772
        %v2136 = vmul.f32 %v2120, %v1772
        %v2137 = vadd.f32 %v2121, %v1908
        %v2138 = vadd.f32 %v2122, %v1909
        %v2139 = vadd.f32 %v2123, %v1910
        %v2140 = vadd.f32 %v2124, %v1911
        %v2141 = vadd.f32 %v2125, %v1912
        %v2142 = vadd.f32 %v2126, %v1913
        %v2143 = vadd.f32 %v2127, %v1914
        %v2144 = vadd.f32 %v2128, %v1915
        %v2145 = vadd.f32 %v2129, %v1916
        %v2146 = vadd.f32 %v2130, %v1917
        %v2147 = vadd.f32 %v2131, %v1918
        %v2148 = vadd.f32 %v2132, %v1919
        %v2149 = vadd.f32 %v2133, %v1920
        %v2150 = vadd.f32 %v2134, %v1921
        %v2151 = vadd.f32 %v2135, %v1922
        %v2152 = vadd.f32 %v2136, %v1923
        %2153 = vst [vmem:[%s483] sm:$0xff] %v2137
        %2154 = vst [vmem:[%s483 + $0x8] sm:$0xff] %v2138
        %2155 = vst [vmem:[%s483 + $0x10] sm:$0xff] %v2139
        %2156 = vst [vmem:[%s483 + $0x18] sm:$0xff] %v2140
        %2157 = vst [vmem:[%s483 + $0x20] sm:$0xff] %v2141
        %2158 = vst [vmem:[%s483 + $0x28] sm:$0xff] %v2142
        %2159 = vst [vmem:[%s483 + $0x30] sm:$0xff] %v2143
        %2160 = vst [vmem:[%s483 + $0x38] sm:$0xff] %v2144
        %2161 = vst [vmem:[%s483 + $0x40] sm:$0xff] %v2145
        %2162 = vst [vmem:[%s483 + $0x48] sm:$0xff] %v2146
        %2163 = vst [vmem:[%s483 + $0x50] sm:$0xff] %v2147
        %2164 = vst [vmem:[%s483 + $0x58] sm:$0xff] %v2148
        %2165 = vst [vmem:[%s483 + $0x60] sm:$0xff] %v2149
        %2166 = vst [vmem:[%s483 + $0x68] sm:$0xff] %v2150
        %2167 = vst [vmem:[%s483 + $0x70] sm:$0xff] %v2151
        %2168 = vst [vmem:[%s483 + $0x78] sm:$0xff] %v2152
        %2169 = vset.pattern.permute.xlu0 1
        %2170 = vperm.xlu0 %2169, %v1191
        %v2171 = vpop.permute.xlu0 %2170
        %2173 = vset.pattern.permute.xlu0 1
        %2174 = vperm.xlu0 %2173, %v1194
        %v2175 = vpop.permute.xlu0 %2174
        %2177 = vset.pattern.permute.xlu0 1
        %2178 = vperm.xlu0 %2177, %v1199
        %v2179 = vpop.permute.xlu0 %2178
        %2181 = vset.pattern.permute.xlu0 1
        %2182 = vperm.xlu0 %2181, %v1202
        %v2183 = vpop.permute.xlu0 %2182
        %2185 = vset.pattern.permute.xlu0 1
        %2186 = vperm.xlu0 %2185, %v1207
        %v2187 = vpop.permute.xlu0 %2186
        %2189 = vset.pattern.permute.xlu0 1
        %2190 = vperm.xlu0 %2189, %v1210
        %v2191 = vpop.permute.xlu0 %2190
        %2193 = vset.pattern.permute.xlu0 1
        %2194 = vperm.xlu0 %2193, %v1215
        %v2195 = vpop.permute.xlu0 %2194
        %2197 = vset.pattern.permute.xlu0 1
        %2198 = vperm.xlu0 %2197, %v1218
        %v2199 = vpop.permute.xlu0 %2198
        %2201 = vset.pattern.permute.xlu0 1
        %2202 = vperm.xlu0 %2201, %v1223
        %v2203 = vpop.permute.xlu0 %2202
        %2205 = vset.pattern.permute.xlu0 1
        %2206 = vperm.xlu0 %2205, %v1226
        %v2207 = vpop.permute.xlu0 %2206
        %2209 = vset.pattern.permute.xlu0 1
        %2210 = vperm.xlu0 %2209, %v1231
        %v2211 = vpop.permute.xlu0 %2210
        %2213 = vset.pattern.permute.xlu0 1
        %2214 = vperm.xlu0 %2213, %v1234
        %v2215 = vpop.permute.xlu0 %2214
        %2217 = vset.pattern.permute.xlu0 1
        %2218 = vperm.xlu0 %2217, %v1239
        %v2219 = vpop.permute.xlu0 %2218
        %2221 = vset.pattern.permute.xlu0 1
        %2222 = vperm.xlu0 %2221, %v1242
        %v2223 = vpop.permute.xlu0 %2222
        %2225 = vset.pattern.permute.xlu0 1
        %2226 = vperm.xlu0 %2225, %v1247
        %v2227 = vpop.permute.xlu0 %2226
        %2229 = vset.pattern.permute.xlu0 1
        %2230 = vperm.xlu0 %2229, %v1250
        %v2231 = vpop.permute.xlu0 %2230
        %2233 = vmatprep.subr.bf16.mxu0 0
        %2234 = vmatpush1.bf16.xpose.msra.mxu0 %v1084
        %2235 = vmatprep.subr.bf16.mxu0 0
        %2236 = vmatpush1.bf16.xpose.msra.mxu0 %v1085
        %2237 = vmatprep.subr.bf16.mxu0 0
        %2238 = vmatpush1.bf16.xpose.msra.mxu0 %v1086
        %2239 = vmatprep.subr.bf16.mxu0 0
        %2240 = vmatpush1.bf16.xpose.msra.mxu0 %v1087
        %2241 = vmatprep.subr.bf16.mxu0 0
        %2242 = vmatpush1.bf16.xpose.msra.mxu0 %v1088
        %2243 = vmatprep.subr.bf16.mxu0 0
        %2244 = vmatpush1.bf16.xpose.msra.mxu0 %v1089
        %2245 = vmatprep.subr.bf16.mxu0 0
        %2246 = vmatpush1.bf16.xpose.msra.mxu0 %v1090
        %2247 = vmatprep.subr.bf16.mxu0 0
        %2248 = vmatpush1.bf16.xpose.msra.mxu0 %v1091
        %2249 = vmatprep.subr.bf16.mxu0 0
        %2250 = vmatpush1.bf16.xpose.msra.mxu0 0
        %2251 = vmatprep.subr.bf16.mxu0 0
        %2252 = vmatpush1.bf16.xpose.msra.mxu0 0
        %2253 = vmatprep.subr.bf16.mxu0 0
        %2254 = vmatpush1.bf16.xpose.msra.mxu0 0
        %2255 = vmatprep.subr.bf16.mxu0 0
        %2256 = vmatpush1.bf16.xpose.msra.mxu0 0
        %2257 = vmatprep.subr.bf16.mxu0 0
        %2258 = vmatpush1.bf16.xpose.msra.mxu0 0
        %2259 = vmatprep.subr.bf16.mxu0 0
        %2260 = vmatpush1.bf16.xpose.msra.mxu0 0
        %2261 = vmatprep.subr.bf16.mxu0 0
        %2262 = vmatpush1.bf16.xpose.msra.mxu0 0
        %2263 = vmatprep.subr.bf16.mxu0 0
        %2264 = vmatpush1.bf16.xpose.msra.mxu0 0
        %2265 = vmatprep.mubr.bf16.mxu0 0
        %2266 = vmatmul.mubr.bf16.gmra.mrb[0].mxu0 %v1719
        %v2267 = vpop.f32.mrb[0].mxu0
        %v2268 = vadd.f32 %v2171, %v2267
        %v2269 = vpop.f32.mrb[0].mxu0
        %v2270 = vpop.f32.mrb[0].mxu0
        %v2271 = vadd.f32 %v2175, %v2270
        %v2272 = vpop.f32.mrb[0].mxu0
        %2273 = vmatprep.mubr.bf16.mxu0 0
        %2274 = vmatmul.mubr.bf16.gmra.mrb[0].mxu0 %v1723
        %v2275 = vpop.f32.mrb[0].mxu0
        %v2276 = vadd.f32 %v2179, %v2275
        %v2277 = vpop.f32.mrb[0].mxu0
        %v2278 = vpop.f32.mrb[0].mxu0
        %v2279 = vadd.f32 %v2183, %v2278
        %v2280 = vpop.f32.mrb[0].mxu0
        %2281 = vmatprep.mubr.bf16.mxu0 0
        %2282 = vmatmul.mubr.bf16.gmra.mrb[0].mxu0 %v1727
        %v2283 = vpop.f32.mrb[0].mxu0
        %v2284 = vadd.f32 %v2187, %v2283
        %v2285 = vpop.f32.mrb[0].mxu0
        %v2286 = vpop.f32.mrb[0].mxu0
        %v2287 = vadd.f32 %v2191, %v2286
        %v2288 = vpop.f32.mrb[0].mxu0
        %2289 = vmatprep.mubr.bf16.mxu0 0
        %2290 = vmatmul.mubr.bf16.gmra.mrb[0].mxu0 %v1731
        %v2291 = vpop.f32.mrb[0].mxu0
        %v2292 = vadd.f32 %v2195, %v2291
        %v2293 = vpop.f32.mrb[0].mxu0
        %v2294 = vpop.f32.mrb[0].mxu0
        %v2295 = vadd.f32 %v2199, %v2294
        %v2296 = vpop.f32.mrb[0].mxu0
        %2297 = vmatprep.mubr.bf16.mxu0 0
        %2298 = vmatmul.mubr.bf16.gmra.mrb[0].mxu0 %v1735
        %v2299 = vpop.f32.mrb[0].mxu0
        %v2300 = vadd.f32 %v2203, %v2299
        %v2301 = vpop.f32.mrb[0].mxu0
        %v2302 = vpop.f32.mrb[0].mxu0
        %v2303 = vadd.f32 %v2207, %v2302
        %v2304 = vpop.f32.mrb[0].mxu0
        %2305 = vmatprep.mubr.bf16.mxu0 0
        %2306 = vmatmul.mubr.bf16.gmra.mrb[0].mxu0 %v1739
        %v2307 = vpop.f32.mrb[0].mxu0
        %v2308 = vadd.f32 %v2211, %v2307
        %v2309 = vpop.f32.mrb[0].mxu0
        %v2310 = vpop.f32.mrb[0].mxu0
        %v2311 = vadd.f32 %v2215, %v2310
        %v2312 = vpop.f32.mrb[0].mxu0
        %2313 = vmatprep.mubr.bf16.mxu0 0
        %2314 = vmatmul.mubr.bf16.gmra.mrb[0].mxu0 %v1743
        %v2315 = vpop.f32.mrb[0].mxu0
        %v2316 = vadd.f32 %v2219, %v2315
        %v2317 = vpop.f32.mrb[0].mxu0
        %v2318 = vpop.f32.mrb[0].mxu0
        %v2319 = vadd.f32 %v2223, %v2318
        %v2320 = vpop.f32.mrb[0].mxu0
        %2321 = vmatprep.mubr.bf16.mxu0 0
        %2322 = vmatmul.mubr.bf16.gmra.mrb[0].mxu0 %v1747
        %v2323 = vpop.f32.mrb[0].mxu0
        %v2324 = vadd.f32 %v2227, %v2323
        %v2325 = vpop.f32.mrb[0].mxu0
        %v2326 = vpop.f32.mrb[0].mxu0
        %v2327 = vadd.f32 %v2231, %v2326
        %v2328 = vpop.f32.mrb[0].mxu0
        %2329 = vdwg.mxu0
        %v2330 = vlaneseq
        %v2331 = vshrl.u32 %v2330, 7
        %v2332 = vsub.s32 1, %v2331
        %v2333 = vrot.slane %v1295, %v2332
        %v2334 = vadd.f32 %v2268, %v2333
        %v2335 = vadd.f32 %v2271, %v2333
        %v2336 = vadd.f32 %v2276, %v2333
        %v2337 = vadd.f32 %v2279, %v2333
        %v2338 = vadd.f32 %v2284, %v2333
        %v2339 = vadd.f32 %v2287, %v2333
        %v2340 = vadd.f32 %v2292, %v2333
        %v2341 = vadd.f32 %v2295, %v2333
        %v2342 = vadd.f32 %v2300, %v2333
        %v2343 = vadd.f32 %v2303, %v2333
        %v2344 = vadd.f32 %v2308, %v2333
        %v2345 = vadd.f32 %v2311, %v2333
        %v2346 = vadd.f32 %v2316, %v2333
        %v2347 = vadd.f32 %v2319, %v2333
        %v2348 = vadd.f32 %v2324, %v2333
        %v2349 = vadd.f32 %v2327, %v2333
        %v2350 = vmul.f32 %v2334, %v1772
        %v2351 = vmul.f32 %v2335, %v1772
        %v2352 = vmul.f32 %v2336, %v1772
        %v2353 = vmul.f32 %v2337, %v1772
        %v2354 = vmul.f32 %v2338, %v1772
        %v2355 = vmul.f32 %v2339, %v1772
        %v2356 = vmul.f32 %v2340, %v1772
        %v2357 = vmul.f32 %v2341, %v1772
        %v2358 = vmul.f32 %v2342, %v1772
        %v2359 = vmul.f32 %v2343, %v1772
        %v2360 = vmul.f32 %v2344, %v1772
        %v2361 = vmul.f32 %v2345, %v1772
        %v2362 = vmul.f32 %v2346, %v1772
        %v2363 = vmul.f32 %v2347, %v1772
        %v2364 = vmul.f32 %v2348, %v1772
        %v2365 = vmul.f32 %v2349, %v1772
        %v2366 = vadd.f32 %v2350, %v1908
        %v2367 = vadd.f32 %v2351, %v1909
        %v2368 = vadd.f32 %v2352, %v1910
        %v2369 = vadd.f32 %v2353, %v1911
        %v2370 = vadd.f32 %v2354, %v1912
        %v2371 = vadd.f32 %v2355, %v1913
        %v2372 = vadd.f32 %v2356, %v1914
        %v2373 = vadd.f32 %v2357, %v1915
        %v2374 = vadd.f32 %v2358, %v1916
        %v2375 = vadd.f32 %v2359, %v1917
        %v2376 = vadd.f32 %v2360, %v1918
        %v2377 = vadd.f32 %v2361, %v1919
        %v2378 = vadd.f32 %v2362, %v1920
        %v2379 = vadd.f32 %v2363, %v1921
        %v2380 = vadd.f32 %v2364, %v1922
        %v2381 = vadd.f32 %v2365, %v1923
        %s2382 = scalar_lea.vmem %s483, 128 [#allocation2]
        %2383 = vst [vmem:[%s2382] sm:$0xff] %v2366
        %2384 = vst [vmem:[%s2382 + $0x8] sm:$0xff] %v2367
        %2385 = vst [vmem:[%s2382 + $0x10] sm:$0xff] %v2368
        %2386 = vst [vmem:[%s2382 + $0x18] sm:$0xff] %v2369
        %2387 = vst [vmem:[%s2382 + $0x20] sm:$0xff] %v2370
        %2388 = vst [vmem:[%s2382 + $0x28] sm:$0xff] %v2371
        %2389 = vst [vmem:[%s2382 + $0x30] sm:$0xff] %v2372
        %2390 = vst [vmem:[%s2382 + $0x38] sm:$0xff] %v2373
        %2391 = vst [vmem:[%s2382 + $0x40] sm:$0xff] %v2374
        %2392 = vst [vmem:[%s2382 + $0x48] sm:$0xff] %v2375
        %2393 = vst [vmem:[%s2382 + $0x50] sm:$0xff] %v2376
        %2394 = vst [vmem:[%s2382 + $0x58] sm:$0xff] %v2377
        %2395 = vst [vmem:[%s2382 + $0x60] sm:$0xff] %v2378
        %2396 = vst [vmem:[%s2382 + $0x68] sm:$0xff] %v2379
        %2397 = vst [vmem:[%s2382 + $0x70] sm:$0xff] %v2380
        %2398 = vst [vmem:[%s2382 + $0x78] sm:$0xff] %v2381
        %2399 = vset.pattern.permute.xlu0 2
        %2400 = vperm.xlu0 %2399, %v1191
        %v2401 = vpop.permute.xlu0 %2400
        %2403 = vset.pattern.permute.xlu0 2
        %2404 = vperm.xlu0 %2403, %v1194
        %v2405 = vpop.permute.xlu0 %2404
        %2407 = vset.pattern.permute.xlu0 2
        %2408 = vperm.xlu0 %2407, %v1199
        %v2409 = vpop.permute.xlu0 %2408
        %2411 = vset.pattern.permute.xlu0 2
        %2412 = vperm.xlu0 %2411, %v1202
        %v2413 = vpop.permute.xlu0 %2412
        %2415 = vset.pattern.permute.xlu0 2
        %2416 = vperm.xlu0 %2415, %v1207
        %v2417 = vpop.permute.xlu0 %2416
        %2419 = vset.pattern.permute.xlu0 2
        %2420 = vperm.xlu0 %2419, %v1210
        %v2421 = vpop.permute.xlu0 %2420
        %2423 = vset.pattern.permute.xlu0 2
        %2424 = vperm.xlu0 %2423, %v1215
        %v2425 = vpop.permute.xlu0 %2424
        %2427 = vset.pattern.permute.xlu0 2
        %2428 = vperm.xlu0 %2427, %v1218
        %v2429 = vpop.permute.xlu0 %2428
        %2431 = vset.pattern.permute.xlu0 2
        %2432 = vperm.xlu0 %2431, %v1223
        %v2433 = vpop.permute.xlu0 %2432
        %2435 = vset.pattern.permute.xlu0 2
        %2436 = vperm.xlu0 %2435, %v1226
        %v2437 = vpop.permute.xlu0 %2436
        %2439 = vset.pattern.permute.xlu0 2
        %2440 = vperm.xlu0 %2439, %v1231
        %v2441 = vpop.permute.xlu0 %2440
        %2443 = vset.pattern.permute.xlu0 2
        %2444 = vperm.xlu0 %2443, %v1234
        %v2445 = vpop.permute.xlu0 %2444
        %2447 = vset.pattern.permute.xlu0 2
        %2448 = vperm.xlu0 %2447, %v1239
        %v2449 = vpop.permute.xlu0 %2448
        %2451 = vset.pattern.permute.xlu0 2
        %2452 = vperm.xlu0 %2451, %v1242
        %v2453 = vpop.permute.xlu0 %2452
        %2455 = vset.pattern.permute.xlu0 2
        %2456 = vperm.xlu0 %2455, %v1247
        %v2457 = vpop.permute.xlu0 %2456
        %2459 = vset.pattern.permute.xlu0 2
        %2460 = vperm.xlu0 %2459, %v1250
        %v2461 = vpop.permute.xlu0 %2460
        %2463 = vmatprep.subr.bf16.mxu0 0
        %2464 = vmatpush1.bf16.xpose.msra.mxu0 %v1084
        %2465 = vmatprep.subr.bf16.mxu0 0
        %2466 = vmatpush1.bf16.xpose.msra.mxu0 %v1085
        %2467 = vmatprep.subr.bf16.mxu0 0
        %2468 = vmatpush1.bf16.xpose.msra.mxu0 %v1086
        %2469 = vmatprep.subr.bf16.mxu0 0
        %2470 = vmatpush1.bf16.xpose.msra.mxu0 %v1087
        %2471 = vmatprep.subr.bf16.mxu0 0
        %2472 = vmatpush1.bf16.xpose.msra.mxu0 %v1088
        %2473 = vmatprep.subr.bf16.mxu0 0
        %2474 = vmatpush1.bf16.xpose.msra.mxu0 %v1089
        %2475 = vmatprep.subr.bf16.mxu0 0
        %2476 = vmatpush1.bf16.xpose.msra.mxu0 %v1090
        %2477 = vmatprep.subr.bf16.mxu0 0
        %2478 = vmatpush1.bf16.xpose.msra.mxu0 %v1091
        %2479 = vmatprep.subr.bf16.mxu0 0
        %2480 = vmatpush1.bf16.xpose.msra.mxu0 0
        %2481 = vmatprep.subr.bf16.mxu0 0
        %2482 = vmatpush1.bf16.xpose.msra.mxu0 0
        %2483 = vmatprep.subr.bf16.mxu0 0
        %2484 = vmatpush1.bf16.xpose.msra.mxu0 0
        %2485 = vmatprep.subr.bf16.mxu0 0
        %2486 = vmatpush1.bf16.xpose.msra.mxu0 0
        %2487 = vmatprep.subr.bf16.mxu0 0
        %2488 = vmatpush1.bf16.xpose.msra.mxu0 0
        %2489 = vmatprep.subr.bf16.mxu0 0
        %2490 = vmatpush1.bf16.xpose.msra.mxu0 0
        %2491 = vmatprep.subr.bf16.mxu0 0
        %2492 = vmatpush1.bf16.xpose.msra.mxu0 0
        %2493 = vmatprep.subr.bf16.mxu0 0
        %2494 = vmatpush1.bf16.xpose.msra.mxu0 0
        %2495 = vmatprep.mubr.bf16.mxu0 0
        %2496 = vmatmul.mubr.bf16.gmra.mrb[0].mxu0 %v1720
        %v2497 = vpop.f32.mrb[0].mxu0
        %v2498 = vadd.f32 %v2401, %v2497
        %v2499 = vpop.f32.mrb[0].mxu0
        %v2500 = vpop.f32.mrb[0].mxu0
        %v2501 = vadd.f32 %v2405, %v2500
        %v2502 = vpop.f32.mrb[0].mxu0
        %2503 = vmatprep.mubr.bf16.mxu0 0
        %2504 = vmatmul.mubr.bf16.gmra.mrb[0].mxu0 %v1724
        %v2505 = vpop.f32.mrb[0].mxu0
        %v2506 = vadd.f32 %v2409, %v2505
        %v2507 = vpop.f32.mrb[0].mxu0
        %v2508 = vpop.f32.mrb[0].mxu0
        %v2509 = vadd.f32 %v2413, %v2508
        %v2510 = vpop.f32.mrb[0].mxu0
        %2511 = vmatprep.mubr.bf16.mxu0 0
        %2512 = vmatmul.mubr.bf16.gmra.mrb[0].mxu0 %v1728
        %v2513 = vpop.f32.mrb[0].mxu0
        %v2514 = vadd.f32 %v2417, %v2513
        %v2515 = vpop.f32.mrb[0].mxu0
        %v2516 = vpop.f32.mrb[0].mxu0
        %v2517 = vadd.f32 %v2421, %v2516
        %v2518 = vpop.f32.mrb[0].mxu0
        %2519 = vmatprep.mubr.bf16.mxu0 0
        %2520 = vmatmul.mubr.bf16.gmra.mrb[0].mxu0 %v1732
        %v2521 = vpop.f32.mrb[0].mxu0
        %v2522 = vadd.f32 %v2425, %v2521
        %v2523 = vpop.f32.mrb[0].mxu0
        %v2524 = vpop.f32.mrb[0].mxu0
        %v2525 = vadd.f32 %v2429, %v2524
        %v2526 = vpop.f32.mrb[0].mxu0
        %2527 = vmatprep.mubr.bf16.mxu0 0
        %2528 = vmatmul.mubr.bf16.gmra.mrb[0].mxu0 %v1736
        %v2529 = vpop.f32.mrb[0].mxu0
        %v2530 = vadd.f32 %v2433, %v2529
        %v2531 = vpop.f32.mrb[0].mxu0
        %v2532 = vpop.f32.mrb[0].mxu0
        %v2533 = vadd.f32 %v2437, %v2532
        %v2534 = vpop.f32.mrb[0].mxu0
        %2535 = vmatprep.mubr.bf16.mxu0 0
        %2536 = vmatmul.mubr.bf16.gmra.mrb[0].mxu0 %v1740
        %v2537 = vpop.f32.mrb[0].mxu0
        %v2538 = vadd.f32 %v2441, %v2537
        %v2539 = vpop.f32.mrb[0].mxu0
        %v2540 = vpop.f32.mrb[0].mxu0
        %v2541 = vadd.f32 %v2445, %v2540
        %v2542 = vpop.f32.mrb[0].mxu0
        %2543 = vmatprep.mubr.bf16.mxu0 0
        %2544 = vmatmul.mubr.bf16.gmra.mrb[0].mxu0 %v1744
        %v2545 = vpop.f32.mrb[0].mxu0
        %v2546 = vadd.f32 %v2449, %v2545
        %v2547 = vpop.f32.mrb[0].mxu0
        %v2548 = vpop.f32.mrb[0].mxu0
        %v2549 = vadd.f32 %v2453, %v2548
        %v2550 = vpop.f32.mrb[0].mxu0
        %2551 = vmatprep.mubr.bf16.mxu0 0
        %2552 = vmatmul.mubr.bf16.gmra.mrb[0].mxu0 %v1748
        %v2553 = vpop.f32.mrb[0].mxu0
        %v2554 = vadd.f32 %v2457, %v2553
        %v2555 = vpop.f32.mrb[0].mxu0
        %v2556 = vpop.f32.mrb[0].mxu0
        %v2557 = vadd.f32 %v2461, %v2556
        %v2558 = vpop.f32.mrb[0].mxu0
        %2559 = vdwg.mxu0
        %v2560 = vlaneseq
        %v2561 = vshrl.u32 %v2560, 7
        %v2562 = vsub.s32 2, %v2561
        %v2563 = vrot.slane %v1295, %v2562
        %v2564 = vadd.f32 %v2498, %v2563
        %v2565 = vadd.f32 %v2501, %v2563
        %v2566 = vadd.f32 %v2506, %v2563
        %v2567 = vadd.f32 %v2509, %v2563
        %v2568 = vadd.f32 %v2514, %v2563
        %v2569 = vadd.f32 %v2517, %v2563
        %v2570 = vadd.f32 %v2522, %v2563
        %v2571 = vadd.f32 %v2525, %v2563
        %v2572 = vadd.f32 %v2530, %v2563
        %v2573 = vadd.f32 %v2533, %v2563
        %v2574 = vadd.f32 %v2538, %v2563
        %v2575 = vadd.f32 %v2541, %v2563
        %v2576 = vadd.f32 %v2546, %v2563
        %v2577 = vadd.f32 %v2549, %v2563
        %v2578 = vadd.f32 %v2554, %v2563
        %v2579 = vadd.f32 %v2557, %v2563
        %v2580 = vmul.f32 %v2564, %v1772
        %v2581 = vmul.f32 %v2565, %v1772
        %v2582 = vmul.f32 %v2566, %v1772
        %v2583 = vmul.f32 %v2567, %v1772
        %v2584 = vmul.f32 %v2568, %v1772
        %v2585 = vmul.f32 %v2569, %v1772
        %v2586 = vmul.f32 %v2570, %v1772
        %v2587 = vmul.f32 %v2571, %v1772
        %v2588 = vmul.f32 %v2572, %v1772
        %v2589 = vmul.f32 %v2573, %v1772
        %v2590 = vmul.f32 %v2574, %v1772
        %v2591 = vmul.f32 %v2575, %v1772
        %v2592 = vmul.f32 %v2576, %v1772
        %v2593 = vmul.f32 %v2577, %v1772
        %v2594 = vmul.f32 %v2578, %v1772
        %v2595 = vmul.f32 %v2579, %v1772
        %v2596 = vadd.f32 %v2580, %v1908
        %v2597 = vadd.f32 %v2581, %v1909
        %v2598 = vadd.f32 %v2582, %v1910
        %v2599 = vadd.f32 %v2583, %v1911
        %v2600 = vadd.f32 %v2584, %v1912
        %v2601 = vadd.f32 %v2585, %v1913
        %v2602 = vadd.f32 %v2586, %v1914
        %v2603 = vadd.f32 %v2587, %v1915
        %v2604 = vadd.f32 %v2588, %v1916
        %v2605 = vadd.f32 %v2589, %v1917
        %v2606 = vadd.f32 %v2590, %v1918
        %v2607 = vadd.f32 %v2591, %v1919
        %v2608 = vadd.f32 %v2592, %v1920
        %v2609 = vadd.f32 %v2593, %v1921
        %v2610 = vadd.f32 %v2594, %v1922
        %v2611 = vadd.f32 %v2595, %v1923
        %s2612 = scalar_lea.vmem %s483, 256 [#allocation2]
        %2613 = vst [vmem:[%s2612] sm:$0xff] %v2596
        %2614 = vst [vmem:[%s2612 + $0x8] sm:$0xff] %v2597
        %2615 = vst [vmem:[%s2612 + $0x10] sm:$0xff] %v2598
        %2616 = vst [vmem:[%s2612 + $0x18] sm:$0xff] %v2599
        %2617 = vst [vmem:[%s2612 + $0x20] sm:$0xff] %v2600
        %2618 = vst [vmem:[%s2612 + $0x28] sm:$0xff] %v2601
        %2619 = vst [vmem:[%s2612 + $0x30] sm:$0xff] %v2602
        %2620 = vst [vmem:[%s2612 + $0x38] sm:$0xff] %v2603
        %2621 = vst [vmem:[%s2612 + $0x40] sm:$0xff] %v2604
        %2622 = vst [vmem:[%s2612 + $0x48] sm:$0xff] %v2605
        %2623 = vst [vmem:[%s2612 + $0x50] sm:$0xff] %v2606
        %2624 = vst [vmem:[%s2612 + $0x58] sm:$0xff] %v2607
        %2625 = vst [vmem:[%s2612 + $0x60] sm:$0xff] %v2608
        %2626 = vst [vmem:[%s2612 + $0x68] sm:$0xff] %v2609
        %2627 = vst [vmem:[%s2612 + $0x70] sm:$0xff] %v2610
        %2628 = vst [vmem:[%s2612 + $0x78] sm:$0xff] %v2611
        %2629 = vset.pattern.permute.xlu0 3
        %2630 = vperm.xlu0 %2629, %v1191
        %v2631 = vpop.permute.xlu0 %2630
        %2633 = vset.pattern.permute.xlu0 3
        %2634 = vperm.xlu0 %2633, %v1194
        %v2635 = vpop.permute.xlu0 %2634
        %2637 = vset.pattern.permute.xlu0 3
        %2638 = vperm.xlu0 %2637, %v1199
        %v2639 = vpop.permute.xlu0 %2638
        %2641 = vset.pattern.permute.xlu0 3
        %2642 = vperm.xlu0 %2641, %v1202
        %v2643 = vpop.permute.xlu0 %2642
        %2645 = vset.pattern.permute.xlu0 3
        %2646 = vperm.xlu0 %2645, %v1207
        %v2647 = vpop.permute.xlu0 %2646
        %2649 = vset.pattern.permute.xlu0 3
        %2650 = vperm.xlu0 %2649, %v1210
        %v2651 = vpop.permute.xlu0 %2650
        %2653 = vset.pattern.permute.xlu0 3
        %2654 = vperm.xlu0 %2653, %v1215
        %v2655 = vpop.permute.xlu0 %2654
        %2657 = vset.pattern.permute.xlu0 3
        %2658 = vperm.xlu0 %2657, %v1218
        %v2659 = vpop.permute.xlu0 %2658
        %2661 = vset.pattern.permute.xlu0 3
        %2662 = vperm.xlu0 %2661, %v1223
        %v2663 = vpop.permute.xlu0 %2662
        %2665 = vset.pattern.permute.xlu0 3
        %2666 = vperm.xlu0 %2665, %v1226
        %v2667 = vpop.permute.xlu0 %2666
        %2669 = vset.pattern.permute.xlu0 3
        %2670 = vperm.xlu0 %2669, %v1231
        %v2671 = vpop.permute.xlu0 %2670
        %2673 = vset.pattern.permute.xlu0 3
        %2674 = vperm.xlu0 %2673, %v1234
        %v2675 = vpop.permute.xlu0 %2674
        %2677 = vset.pattern.permute.xlu0 3
        %2678 = vperm.xlu0 %2677, %v1239
        %v2679 = vpop.permute.xlu0 %2678
        %2681 = vset.pattern.permute.xlu0 3
        %2682 = vperm.xlu0 %2681, %v1242
        %v2683 = vpop.permute.xlu0 %2682
        %2685 = vset.pattern.permute.xlu0 3
        %2686 = vperm.xlu0 %2685, %v1247
        %v2687 = vpop.permute.xlu0 %2686
        %2689 = vset.pattern.permute.xlu0 3
        %2690 = vperm.xlu0 %2689, %v1250
        %v2691 = vpop.permute.xlu0 %2690
        %2693 = vmatprep.subr.bf16.mxu0 0
        %2694 = vmatpush1.bf16.xpose.msra.mxu0 %v1084
        %2695 = vmatprep.subr.bf16.mxu0 0
        %2696 = vmatpush1.bf16.xpose.msra.mxu0 %v1085
        %2697 = vmatprep.subr.bf16.mxu0 0
        %2698 = vmatpush1.bf16.xpose.msra.mxu0 %v1086
        %2699 = vmatprep.subr.bf16.mxu0 0
        %2700 = vmatpush1.bf16.xpose.msra.mxu0 %v1087
        %2701 = vmatprep.subr.bf16.mxu0 0
        %2702 = vmatpush1.bf16.xpose.msra.mxu0 %v1088
        %2703 = vmatprep.subr.bf16.mxu0 0
        %2704 = vmatpush1.bf16.xpose.msra.mxu0 %v1089
        %2705 = vmatprep.subr.bf16.mxu0 0
        %2706 = vmatpush1.bf16.xpose.msra.mxu0 %v1090
        %2707 = vmatprep.subr.bf16.mxu0 0
        %2708 = vmatpush1.bf16.xpose.msra.mxu0 %v1091
        %2709 = vmatprep.subr.bf16.mxu0 0
        %2710 = vmatpush1.bf16.xpose.msra.mxu0 0
        %2711 = vmatprep.subr.bf16.mxu0 0
        %2712 = vmatpush1.bf16.xpose.msra.mxu0 0
        %2713 = vmatprep.subr.bf16.mxu0 0
        %2714 = vmatpush1.bf16.xpose.msra.mxu0 0
        %2715 = vmatprep.subr.bf16.mxu0 0
        %2716 = vmatpush1.bf16.xpose.msra.mxu0 0
        %2717 = vmatprep.subr.bf16.mxu0 0
        %2718 = vmatpush1.bf16.xpose.msra.mxu0 0
        %2719 = vmatprep.subr.bf16.mxu0 0
        %2720 = vmatpush1.bf16.xpose.msra.mxu0 0
        %2721 = vmatprep.subr.bf16.mxu0 0
        %2722 = vmatpush1.bf16.xpose.msra.mxu0 0
        %2723 = vmatprep.subr.bf16.mxu0 0
        %2724 = vmatpush1.bf16.xpose.msra.mxu0 0
        %2725 = vmatprep.mubr.bf16.mxu0 0
        %2726 = vmatmul.mubr.bf16.gmra.mrb[0].mxu0 %v1721
        %v2727 = vpop.f32.mrb[0].mxu0
        %v2728 = vadd.f32 %v2631, %v2727
        %v2729 = vpop.f32.mrb[0].mxu0
        %v2730 = vpop.f32.mrb[0].mxu0
        %v2731 = vadd.f32 %v2635, %v2730
        %v2732 = vpop.f32.mrb[0].mxu0
        %2733 = vmatprep.mubr.bf16.mxu0 0
        %2734 = vmatmul.mubr.bf16.gmra.mrb[0].mxu0 %v1725
        %v2735 = vpop.f32.mrb[0].mxu0
        %v2736 = vadd.f32 %v2639, %v2735
        %v2737 = vpop.f32.mrb[0].mxu0
        %v2738 = vpop.f32.mrb[0].mxu0
        %v2739 = vadd.f32 %v2643, %v2738
        %v2740 = vpop.f32.mrb[0].mxu0
        %2741 = vmatprep.mubr.bf16.mxu0 0
        %2742 = vmatmul.mubr.bf16.gmra.mrb[0].mxu0 %v1729
        %v2743 = vpop.f32.mrb[0].mxu0
        %v2744 = vadd.f32 %v2647, %v2743
        %v2745 = vpop.f32.mrb[0].mxu0
        %v2746 = vpop.f32.mrb[0].mxu0
        %v2747 = vadd.f32 %v2651, %v2746
        %v2748 = vpop.f32.mrb[0].mxu0
        %2749 = vmatprep.mubr.bf16.mxu0 0
        %2750 = vmatmul.mubr.bf16.gmra.mrb[0].mxu0 %v1733
        %v2751 = vpop.f32.mrb[0].mxu0
        %v2752 = vadd.f32 %v2655, %v2751
        %v2753 = vpop.f32.mrb[0].mxu0
        %v2754 = vpop.f32.mrb[0].mxu0
        %v2755 = vadd.f32 %v2659, %v2754
        %v2756 = vpop.f32.mrb[0].mxu0
        %2757 = vmatprep.mubr.bf16.mxu0 0
        %2758 = vmatmul.mubr.bf16.gmra.mrb[0].mxu0 %v1737
        %v2759 = vpop.f32.mrb[0].mxu0
        %v2760 = vadd.f32 %v2663, %v2759
        %v2761 = vpop.f32.mrb[0].mxu0
        %v2762 = vpop.f32.mrb[0].mxu0
        %v2763 = vadd.f32 %v2667, %v2762
        %v2764 = vpop.f32.mrb[0].mxu0
        %2765 = vmatprep.mubr.bf16.mxu0 0
        %2766 = vmatmul.mubr.bf16.gmra.mrb[0].mxu0 %v1741
        %v2767 = vpop.f32.mrb[0].mxu0
        %v2768 = vadd.f32 %v2671, %v2767
        %v2769 = vpop.f32.mrb[0].mxu0
        %v2770 = vpop.f32.mrb[0].mxu0
        %v2771 = vadd.f32 %v2675, %v2770
        %v2772 = vpop.f32.mrb[0].mxu0
        %2773 = vmatprep.mubr.bf16.mxu0 0
        %2774 = vmatmul.mubr.bf16.gmra.mrb[0].mxu0 %v1745
        %v2775 = vpop.f32.mrb[0].mxu0
        %v2776 = vadd.f32 %v2679, %v2775
        %v2777 = vpop.f32.mrb[0].mxu0
        %v2778 = vpop.f32.mrb[0].mxu0
        %v2779 = vadd.f32 %v2683, %v2778
        %v2780 = vpop.f32.mrb[0].mxu0
        %2781 = vmatprep.mubr.bf16.mxu0 0
        %2782 = vmatmul.mubr.bf16.gmra.mrb[0].mxu0 %v1749
        %v2783 = vpop.f32.mrb[0].mxu0
        %v2784 = vadd.f32 %v2687, %v2783
        %v2785 = vpop.f32.mrb[0].mxu0
        %v2786 = vpop.f32.mrb[0].mxu0
        %v2787 = vadd.f32 %v2691, %v2786
        %v2788 = vpop.f32.mrb[0].mxu0
        %2789 = vdwg.mxu0
        %v2790 = vlaneseq
        %v2791 = vshrl.u32 %v2790, 7
        %v2792 = vsub.s32 3, %v2791
        %v2793 = vrot.slane %v1295, %v2792
        %v2794 = vadd.f32 %v2728, %v2793
        %v2795 = vadd.f32 %v2731, %v2793
        %v2796 = vadd.f32 %v2736, %v2793
        %v2797 = vadd.f32 %v2739, %v2793
        %v2798 = vadd.f32 %v2744, %v2793
        %v2799 = vadd.f32 %v2747, %v2793
        %v2800 = vadd.f32 %v2752, %v2793
        %v2801 = vadd.f32 %v2755, %v2793
        %v2802 = vadd.f32 %v2760, %v2793
        %v2803 = vadd.f32 %v2763, %v2793
        %v2804 = vadd.f32 %v2768, %v2793
        %v2805 = vadd.f32 %v2771, %v2793
        %v2806 = vadd.f32 %v2776, %v2793
        %v2807 = vadd.f32 %v2779, %v2793
        %v2808 = vadd.f32 %v2784, %v2793
        %v2809 = vadd.f32 %v2787, %v2793
        %v2810 = vmul.f32 %v2794, %v1772
        %v2811 = vmul.f32 %v2795, %v1772
        %v2812 = vmul.f32 %v2796, %v1772
        %v2813 = vmul.f32 %v2797, %v1772
        %v2814 = vmul.f32 %v2798, %v1772
        %v2815 = vmul.f32 %v2799, %v1772
        %v2816 = vmul.f32 %v2800, %v1772
        %v2817 = vmul.f32 %v2801, %v1772
        %v2818 = vmul.f32 %v2802, %v1772
        %v2819 = vmul.f32 %v2803, %v1772
        %v2820 = vmul.f32 %v2804, %v1772
        %v2821 = vmul.f32 %v2805, %v1772
        %v2822 = vmul.f32 %v2806, %v1772
        %v2823 = vmul.f32 %v2807, %v1772
        %v2824 = vmul.f32 %v2808, %v1772
        %v2825 = vmul.f32 %v2809, %v1772
        %v2826 = vadd.f32 %v2810, %v1908
        %v2827 = vadd.f32 %v2811, %v1909
        %v2828 = vadd.f32 %v2812, %v1910
        %v2829 = vadd.f32 %v2813, %v1911
        %v2830 = vadd.f32 %v2814, %v1912
        %v2831 = vadd.f32 %v2815, %v1913
        %v2832 = vadd.f32 %v2816, %v1914
        %v2833 = vadd.f32 %v2817, %v1915
        %v2834 = vadd.f32 %v2818, %v1916
        %v2835 = vadd.f32 %v2819, %v1917
        %v2836 = vadd.f32 %v2820, %v1918
        %v2837 = vadd.f32 %v2821, %v1919
        %v2838 = vadd.f32 %v2822, %v1920
        %v2839 = vadd.f32 %v2823, %v1921
        %v2840 = vadd.f32 %v2824, %v1922
        %v2841 = vadd.f32 %v2825, %v1923
        %s2842 = scalar_lea.vmem %s483, 384 [#allocation2]
        %2843 = vst [vmem:[%s2842] sm:$0xff] %v2826
        %2844 = vst [vmem:[%s2842 + $0x8] sm:$0xff] %v2827
        %2845 = vst [vmem:[%s2842 + $0x10] sm:$0xff] %v2828
        %2846 = vst [vmem:[%s2842 + $0x18] sm:$0xff] %v2829
        %2847 = vst [vmem:[%s2842 + $0x20] sm:$0xff] %v2830
        %2848 = vst [vmem:[%s2842 + $0x28] sm:$0xff] %v2831
        %2849 = vst [vmem:[%s2842 + $0x30] sm:$0xff] %v2832
        %2850 = vst [vmem:[%s2842 + $0x38] sm:$0xff] %v2833
        %2851 = vst [vmem:[%s2842 + $0x40] sm:$0xff] %v2834
        %2852 = vst [vmem:[%s2842 + $0x48] sm:$0xff] %v2835
        %2853 = vst [vmem:[%s2842 + $0x50] sm:$0xff] %v2836
        %2854 = vst [vmem:[%s2842 + $0x58] sm:$0xff] %v2837
        %2855 = vst [vmem:[%s2842 + $0x60] sm:$0xff] %v2838
        %2856 = vst [vmem:[%s2842 + $0x68] sm:$0xff] %v2839
        %2857 = vst [vmem:[%s2842 + $0x70] sm:$0xff] %v2840
        %2858 = vst [vmem:[%s2842 + $0x78] sm:$0xff] %v2841
        %s2859 = sand.u32 %s324, 1
        %s2860 = scalar_lea.sflag [#allocation3], %s2859
        %s2861 = sand.u32 %s324, 1
        %s2862 = smul.addr %s2861, 512
        %s2863 = scalar_lea.vmem [#allocation2], %s2862
        // Predicated region
        $region69: #{tpu_custom_call.1} parent=67 // pred_check
          %p2864 = pneg %p334
        $region70: #{tpu_custom_call.1} parent=67 // pred_check_branch
          %2866 = sbr.rel (%p2864) target = $region72
        $region71: #{tpu_custom_call.1} parent=67 // pred_region
          %s2867 = smul.u32 16, %s31
          %s2869 = ssub.s32 8192, 8192
          %2870 = vsyncadd %s2860, %s2869
          %s2871 = smul.addr %s30, 64
          %s2872 = sadd.s32 %s2867, %s2871
          %s2873 = smul.addr %s2872, 128
          %s2874 = scalar_lea.hbm %s12, %s2873
          %s2875 = sshll.u32 %s2863, 4
          %s2876 = int_to_ptr.vmem [resolvable:$true] %s2875
          %2881 = dma.vmem_to_hbm [thread:$0]  %s2876, 8192, %s2874, %s2860, 128, 128, 8
        $region72: #{tpu_custom_call.1} parent=67 // pred_fallthru
          _
      $region68: #{tpu_custom_call.1} parent=5 // pred_fallthru
        _
      %p2882 = scmp.le.s32.totalorder 2, %s21
      // Predicated region
      $region73: #{tpu_custom_call.1} parent=5 // pred_check
        %p2883 = pneg %p2882
      $region74: #{tpu_custom_call.1} parent=5 // pred_check_branch
        %2885 = sbr.rel (%p2883) target = $region76
      $region75: #{tpu_custom_call.1} parent=5 // pred_region
        %s2886 = ssub.s32 %s21, 2
        // Predicated region
        $region77: #{tpu_custom_call.1} parent=75 // pred_check
          %p2887 = pneg %p340
        $region78: #{tpu_custom_call.1} parent=75 // pred_check_branch
          %2889 = sbr.rel (%p2887) target = $region80
        $region79: #{tpu_custom_call.1} parent=75 // pred_region
          %s2890 = sand.u32 %s325, 1
          %s2891 = scalar_lea.sflag [#allocation3], %s2890
          %s2892 = sand.u32 %s325, 1
          %s2893 = smul.addr %s2892, 512
          %s2894 = scalar_lea.vmem [#allocation2], %s2893
          %2895 = dma.done %s2891, 8192
        $region80: #{tpu_custom_call.1} parent=75 // pred_fallthru
          _
      $region76: #{tpu_custom_call.1} parent=5 // pred_fallthru
        _
    $region6: #{tpu_custom_call.1} parent=1 // loop_footer
      %s25 = sadd.s32 1, %s21
    $region7: #{tpu_custom_call.1} parent=1 // loop_footer_branch
      %20 = sbr.rel target = $region3
    $region8: #{tpu_custom_call.1} parent=1 // loop_exit
      _
    %2896 = vsyncpa [#allocation3], 1
    %s2897 = scalar_lea.sflag [#allocation3], 1
    %2898 = vsyncpa %s2897, 1

</llo_original>
